<compile_context>
chip_gen: v5e
topology: v5e:2x2
jax: 0.10.0
libtpu: 0.0.40
codegen_flags: <defaults>
</compile_context>

<pallas_src>
import math
from functools import lru_cache

import jax
import jax.numpy as jnp
from jax import lax
from jax.experimental import pallas as pl
from jax.experimental.pallas import tpu as pltpu


@lru_cache(maxsize=None)
def _vmem_limit():
    """Per-chip scoped-VMEM budget (bytes)."""
    try:
        cap = int(pltpu.get_tpu_info().vmem_capacity_bytes)
    except Exception:
        return 48 * 1024 * 1024
    if cap >= 128 * 1024 * 1024:          # v5e / v6e: 128 MiB physical
        return 64 * 1024 * 1024
    # v7x: 64 MiB per TensorCore -> leave headroom for compiler scratch.
    return min(44 * 1024 * 1024, (cap * 3) // 4)


def _pick_tile(dim, target, gran):
    """Largest tile <= target that divides `dim` and is a multiple of `gran`.
    Falls back to the full dimension (always a legal block size).
    TODO(synk): for large prime dims this falls back to the full dim; add a
    padding path if such shapes ever appear."""
    if dim <= target:
        return dim
    t = (target // gran) * gran
    while t >= gran:
        if dim % t == 0:
            return t
        t -= gran
    return dim


# ------------------------- tiled linear (+ bias) kernel ------------------------- #

def _linear_bias_kernel(x_ref, w_ref, b_ref, o_ref, acc_ref):
    k = pl.program_id(2)

    @pl.when(k == 0)
    def _():
        acc_ref[...] = jnp.zeros(acc_ref.shape, acc_ref.dtype)

    acc_ref[...] += jnp.dot(x_ref[...], w_ref[...],
                            preferred_element_type=jnp.float32)

    @pl.when(k == pl.num_programs(2) - 1)
    def _():
        o_ref[...] = (acc_ref[...] + b_ref[...]).astype(o_ref.dtype)


def linear_tiled(x, w, b, out_dtype, tm=512, tn=512, tk=1024):
    """(M, K) @ (K, N) + (1, N).  bf16 operands, f32 accumulation."""
    M, K = x.shape
    N = w.shape[1]
    tm = _pick_tile(M, tm, 8)
    tn = _pick_tile(N, tn, 128)
    tk = _pick_tile(K, tk, 128)
    grid = (M // tm, N // tn, K // tk)
    return pl.pallas_call(
        _linear_bias_kernel,
        out_shape=jax.ShapeDtypeStruct((M, N), out_dtype),
        grid_spec=pltpu.PrefetchScalarGridSpec(
            num_scalar_prefetch=0,
            grid=grid,
            in_specs=[
                pl.BlockSpec((tm, tk), lambda i, j, k: (i, k)),
                pl.BlockSpec((tk, tn), lambda i, j, k: (k, j)),
                pl.BlockSpec((1, tn), lambda i, j, k: (0, j)),
            ],
            out_specs=pl.BlockSpec((tm, tn), lambda i, j, k: (i, j)),
            scratch_shapes=[pltpu.VMEM((tm, tn), jnp.float32)],
        ),
        compiler_params=pltpu.CompilerParams(
            dimension_semantics=("parallel", "parallel", "arbitrary"),
            vmem_limit_bytes=_vmem_limit(),
        ),
    )(x, w, b)


# ----------------------------- RoPE pre-rotation kernel ------------------------- #

def _rope_kernel(q_ref, k_ref, c_ref, s_ref, qo_ref, ko_ref):
    c = c_ref[...][None, :, :]            # (1, tq, Dh/2) f32
    s = s_ref[...][None, :, :]
    for x_ref, o_ref in ((q_ref, qo_ref), (k_ref, ko_ref)):
        x = x_ref[...].astype(jnp.float32)       # (H, tq, Dh)
        half = x.shape[-1] // 2
        x1 = x[..., :half]
        x2 = x[..., half:]
        o_ref[...] = jnp.concatenate(
            [x1 * c - x2 * s, x2 * c + x1 * s], axis=-1).astype(o_ref.dtype)


def rope_rotate(q, k, cos_half, sin_half, n_heads, tq=256):
    """Apply RoPE (rotate_half formulation) to q and k once, outside attention.

    q, k: (B*H, S, Dh) bf16; cos/sin: (S, Dh/2) f32.  Returns rotated bf16."""
    BH, S, Dh = q.shape
    H = n_heads
    half = Dh // 2
    tq = _pick_tile(S, tq, 8)
    grid = (BH // H, S // tq)
    spec_qk = pl.BlockSpec((H, tq, Dh), lambda b, i: (b, i, 0))
    spec_cs = pl.BlockSpec((tq, half), lambda b, i: (i, 0))
    return pl.pallas_call(
        _rope_kernel,
        out_shape=(jax.ShapeDtypeStruct(q.shape, q.dtype),
                   jax.ShapeDtypeStruct(k.shape, k.dtype)),
        grid_spec=pltpu.PrefetchScalarGridSpec(
            num_scalar_prefetch=0,
            grid=grid,
            in_specs=[spec_qk, spec_qk, spec_cs, spec_cs],
            out_specs=[spec_qk, spec_qk],
        ),
        compiler_params=pltpu.CompilerParams(
            dimension_semantics=("parallel", "parallel"),
            vmem_limit_bytes=_vmem_limit(),
        ),
    )(q, k, cos_half, sin_half)


# --------------------------- flash attention (pre-rotated) ---------------------- #

def _flash_attn_kernel(q_ref, k_ref, v_ref, o_ref, m_ref, l_ref, acc_ref):
    ki = pl.program_id(2)

    @pl.when(ki == 0)
    def _():
        m_ref[...] = jnp.full(m_ref.shape, -jnp.inf, m_ref.dtype)
        l_ref[...] = jnp.zeros(l_ref.shape, l_ref.dtype)
        acc_ref[...] = jnp.zeros(acc_ref.shape, acc_ref.dtype)

    # Single full-depth QK^T (q already carries the 1/sqrt(Dh) scale and RoPE).
    s = lax.dot_general(q_ref[0], k_ref[0], (((1,), (1,)), ((), ())),
                        preferred_element_type=jnp.float32)       # (tq, tk)

    # online softmax recurrence
    m_prev = m_ref[...]
    m_new = jnp.maximum(m_prev, s.max(axis=-1, keepdims=True))
    alpha = jnp.exp(m_prev - m_new)
    p = jnp.exp(s - m_new)
    l_ref[...] = alpha * l_ref[...] + p.sum(axis=-1, keepdims=True)
    acc_ref[...] = alpha * acc_ref[...] + jnp.dot(
        p.astype(jnp.bfloat16), v_ref[0], preferred_element_type=jnp.float32)
    m_ref[...] = m_new

    @pl.when(ki == pl.num_programs(2) - 1)
    def _():
        o_ref[0] = (acc_ref[...] *
                    pl.reciprocal(l_ref[...], approx=True)).astype(o_ref.dtype)


def flash_attention(q, k, v, tq=512, tk=256):
    """q/k/v: (B*H, S, Dh) bf16 (q/k pre-rotated, q pre-scaled) -> (B*H, S, Dh)."""
    BH, S, Dh = q.shape
    tq = _pick_tile(S, tq, 8)
    tk = _pick_tile(S, tk, 8)
    grid = (BH, S // tq, S // tk)
    return pl.pallas_call(
        _flash_attn_kernel,
        out_shape=jax.ShapeDtypeStruct((BH, S, Dh), jnp.bfloat16),
        grid_spec=pltpu.PrefetchScalarGridSpec(
            num_scalar_prefetch=0,
            grid=grid,
            in_specs=[
                pl.BlockSpec((1, tq, Dh), lambda b, qi, ki: (b, qi, 0)),
                pl.BlockSpec((1, tk, Dh), lambda b, qi, ki: (b, ki, 0)),
                pl.BlockSpec((1, tk, Dh), lambda b, qi, ki: (b, ki, 0)),
            ],
            out_specs=pl.BlockSpec((1, tq, Dh), lambda b, qi, ki: (b, qi, 0)),
            scratch_shapes=[
                pltpu.VMEM((tq, 1), jnp.float32),    # running max m
                pltpu.VMEM((tq, 1), jnp.float32),    # running sum l
                pltpu.VMEM((tq, Dh), jnp.float32),   # output accumulator
            ],
        ),
        compiler_params=pltpu.CompilerParams(
            dimension_semantics=("parallel", "parallel", "arbitrary"),
            vmem_limit_bytes=_vmem_limit(),
        ),
    )(q, k, v)


# ---------------------------- one-time parameter prep --------------------------- #

def prepare_params(params, n_heads, max_seq_len=2048):
    """Done once (outside the per-call forward): weight concat, bf16 casts,
    1/sqrt(Dh) scale folded into Wq/bq, RoPE cos/sin tables."""
    D = params["wq"].shape[0]
    Dh = D // n_heads
    scale = 1.0 / math.sqrt(Dh)
    w_qkv = jnp.concatenate(
        [params["wq"] * scale, params["wk"], params["wv"]], axis=1
    ).astype(jnp.bfloat16)                                         # (D, 3D)
    b_qkv = jnp.concatenate(
        [params["bq"] * scale, params["bk"], params["bv"]], axis=1)  # (1, 3D) f32
    inv_freq = 1.0 / (10000.0 ** (jnp.arange(0, Dh, 2, dtype=jnp.float32) / Dh))
    freqs = jnp.arange(max_seq_len, dtype=jnp.float32)[:, None] * inv_freq[None, :]
    return dict(
        w_qkv=w_qkv,
        b_qkv=b_qkv,
        w_o=params["wo"].astype(jnp.bfloat16),
        b_o=params["bo"],
        cos_half=jnp.cos(freqs),                                   # (max_S, Dh/2)
        sin_half=jnp.sin(freqs),
    )


# ------------------------------- module forward -------------------------------- #

def multi_head_attention(x, prepped, n_heads):
    """Pallas forward pass of MultiHeadAttention (attention_mask=None path)."""
    B, S, D = x.shape
    H = n_heads
    Dh = D // H

    # Fused QKV projection (one kernel, x read from HBM once).
    xb = x.reshape(B * S, D).astype(jnp.bfloat16)
    qkv = linear_tiled(xb, prepped["w_qkv"], prepped["b_qkv"], jnp.bfloat16)

    # Single layout transpose: (B*S, 3D) -> (3, B*H, S, Dh).
    # TODO(synk): head-sliced index_map would avoid this, but Dh < 128 breaks
    # the 128-lane block-shape rule, so the transpose stays in XLA.
    qkv = qkv.reshape(B, S, 3, H, Dh).transpose(2, 0, 3, 1, 4)
    qkv = qkv.reshape(3, B * H, S, Dh)
    q, k, v = qkv[0], qkv[1], qkv[2]

    # RoPE applied exactly once (scale already folded into Wq/bq).
    cos_half = prepped["cos_half"][:S]
    sin_half = prepped["sin_half"][:S]
    q, k = rope_rotate(q, k, cos_half, sin_half, n_heads=H)

    attn = flash_attention(q, k, v)                                # (B*H, S, Dh)

    attn = attn.reshape(B, H, S, Dh).transpose(0, 2, 1, 3).reshape(B * S, D)
    out = linear_tiled(attn, prepped["w_o"], prepped["b_o"], jnp.float32)
    return out.reshape(B, S, D)


# --------------------------- pure-JAX f32 reference ---------------------------- #

def reference_mha(x, p, n_heads):
    B, S, D = x.shape
    H = n_heads
    Dh = D // H
    q = x @ p["wq"] + p["bq"]
    k = x @ p["wk"] + p["bk"]
    v = x @ p["wv"] + p["bv"]
    q = q.reshape(B, S, H, Dh).transpose(0, 2, 1, 3)
    k = k.reshape(B, S, H, Dh).transpose(0, 2, 1, 3)
    v = v.reshape(B, S, H, Dh).transpose(0, 2, 1, 3)

    inv_freq = 1.0 / (10000.0 ** (jnp.arange(0, Dh, 2, dtype=jnp.float32) / Dh))
    freqs = jnp.arange(S, dtype=jnp.float32)[:, None] * inv_freq[None, :]
    emb = jnp.concatenate([freqs, freqs], axis=-1)
    cos, sin = jnp.cos(emb), jnp.sin(emb)

    def rot_half(t):
        hh = t.shape[-1] // 2
        return jnp.concatenate([-t[..., hh:], t[..., :hh]], axis=-1)

    q = q * cos + rot_half(q) * sin
    k = k * cos + rot_half(k) * sin
    s = jnp.einsum("bhqd,bhkd->bhqk", q, k) / math.sqrt(Dh)
    a = jax.nn.softmax(s, axis=-1)
    o = jnp.einsum("bhqk,bhkd->bhqd", a, v)
    o = o.transpose(0, 2, 1, 3).reshape(B, S, D)
    return o @ p["wo"] + p["bo"]


# ------------------------------------- main ------------------------------------- #

if __name__ == "__main__":
    B, S, D, H = 2, 16, 64, 4   # small shapes: head_dim = 16

    key = jax.random.PRNGKey(0)
    ks = jax.random.split(key, 9)
    std = 1.0 / math.sqrt(D)
    params = dict(
        wq=std * jax.random.normal(ks[0], (D, D), jnp.float32),
        wk=std * jax.random.normal(ks[1], (D, D), jnp.float32),
        wv=std * jax.random.normal(ks[2], (D, D), jnp.float32),
        wo=std * jax.random.normal(ks[3], (D, D), jnp.float32),
        bq=0.02 * jax.random.normal(ks[4], (1, D), jnp.float32),
        bk=0.02 * jax.random.normal(ks[5], (1, D), jnp.float32),
        bv=0.02 * jax.random.normal(ks[6], (1, D), jnp.float32),
        bo=0.02 * jax.random.normal(ks[7], (1, D), jnp.float32),
    )
    x = jax.random.normal(ks[8], (B, S, D), jnp.float32)

    # One-time parameter prep (weight concat / casts / scale folding / RoPE tables).
    prepped = jax.tree_util.tree_map(jax.block_until_ready,
                                     prepare_params(params, H, max_seq_len=64))

    mha = jax.jit(multi_head_attention, static_argnums=2)
    out = jax.block_until_ready(mha(x, prepped, H))

    assert out.shape == (B, S, D)
    assert bool(jnp.all(jnp.isfinite(out)))

    # Sanity check vs a pure-JAX reference (loose tolerance: bf16 MXU path).
    ref = reference_mha(x, params, H)
    max_err = float(jnp.max(jnp.abs(out - ref)))
    assert max_err < 2e-1, f"kernel mismatch vs reference: max abs err {max_err}"

    print("KERNEL_OK")
</pallas_src>

<mosaic_0001>
module attributes {stable_mosaic.version = 11 : i64} {
  func.func @_linear_bias_kernel(%arg0: i32, %arg1: i32, %arg2: i32, %arg3: memref<32x64xbf16, #tpu.memory_space<vmem>>, %arg4: memref<64x192xbf16, #tpu.memory_space<vmem>>, %arg5: memref<1x192xf32, #tpu.memory_space<vmem>>, %arg6: memref<32x192xbf16, #tpu.memory_space<vmem>>, %arg7: memref<32x192xf32, #tpu.memory_space<vmem>>) attributes {dimension_semantics = [#tpu.dimension_semantics<parallel>, #tpu.dimension_semantics<parallel>, #tpu.dimension_semantics<arbitrary>], iteration_bounds = array<i64: 1, 1, 1>, scalar_prefetch = 0 : i64, scratch_operands = 1 : i64, tpu.core_type = #tpu.core_type<tc>, window_params = [{transform_indices = @transform_0, window_bounds = array<i64: 32, 64>}, {transform_indices = @transform_1, window_bounds = array<i64: 64, 192>}, {transform_indices = @transform_2, window_bounds = array<i64: 1, 192>}, {transform_indices = @transform_3, window_bounds = array<i64: 32, 192>}]} {
    %c0_i32 = arith.constant 0 : i32
    %0 = arith.cmpi eq, %arg2, %c0_i32 : i32
    %1 = arith.extui %0 : i1 to i32
    %c0_i32_0 = arith.constant 0 : i32
    %2 = arith.cmpi ne, %1, %c0_i32_0 : i32
    scf.if %2 {
      %cst_10 = arith.constant 0.000000e+00 : f32
      %12 = vector.broadcast %cst_10 : f32 to vector<32x192xf32>
      %c0_11 = arith.constant 0 : index
      %c0_12 = arith.constant 0 : index
      %13 = vector.load %arg7[%c0_11, %c0_12] : memref<32x192xf32, #tpu.memory_space<vmem>>, vector<32x192xf32>
      tpu.vector_store %arg7[%c0_11, %c0_12], %12 {strides = array<i32>} : memref<32x192xf32, #tpu.memory_space<vmem>>, vector<32x192xf32>,
    } else {
    }
    %c0 = arith.constant 0 : index
    %c0_1 = arith.constant 0 : index
    %3 = vector.load %arg7[%c0, %c0_1] : memref<32x192xf32, #tpu.memory_space<vmem>>, vector<32x192xf32>
    %c0_2 = arith.constant 0 : index
    %c0_3 = arith.constant 0 : index
    %4 = vector.load %arg3[%c0_2, %c0_3] : memref<32x64xbf16, #tpu.memory_space<vmem>>, vector<32x64xbf16>
    %c0_4 = arith.constant 0 : index
    %c0_5 = arith.constant 0 : index
    %5 = vector.load %arg4[%c0_4, %c0_5] : memref<64x192xbf16, #tpu.memory_space<vmem>>, vector<64x192xbf16>
    %cst = arith.constant dense<0.000000e+00> : vector<32x192xf32>
    %6 = tpu.matmul %4, %5, %cst {dimension_numbers = #tpu.dot_dimension_numbers<[1], [0], [0], [1], [0, 0, 1, 1], [], []>} : vector<32x64xbf16>, vector<64x192xbf16>, vector<32x192xf32> -> vector<32x192xf32>
    %7 = arith.addf %3, %6 : vector<32x192xf32>
    %c0_6 = arith.constant 0 : index
    %c0_7 = arith.constant 0 : index
    %8 = vector.load %arg7[%c0_6, %c0_7] : memref<32x192xf32, #tpu.memory_space<vmem>>, vector<32x192xf32>
    tpu.vector_store %arg7[%c0_6, %c0_7], %7 {strides = array<i32>} : memref<32x192xf32, #tpu.memory_space<vmem>>, vector<32x192xf32>,
    %c0_i32_8 = arith.constant 0 : i32
    %9 = arith.cmpi eq, %arg2, %c0_i32_8 : i32
    %10 = arith.extui %9 : i1 to i32
    %c0_i32_9 = arith.constant 0 : i32
    %11 = arith.cmpi ne, %10, %c0_i32_9 : i32
    scf.if %11 {
      %c0_10 = arith.constant 0 : index
      %c0_11 = arith.constant 0 : index
      %12 = vector.load %arg7[%c0_10, %c0_11] : memref<32x192xf32, #tpu.memory_space<vmem>>, vector<32x192xf32>
      %c0_12 = arith.constant 0 : index
      %c0_13 = arith.constant 0 : index
      %13 = vector.load %arg5[%c0_12, %c0_13] : memref<1x192xf32, #tpu.memory_space<vmem>>, vector<1x192xf32>
      %14 = vector.broadcast %13 : vector<1x192xf32> to vector<32x192xf32>
      %15 = arith.addf %12, %14 : vector<32x192xf32>
      %16 = arith.truncf %15 : vector<32x192xf32> to vector<32x192xbf16>
      %c0_14 = arith.constant 0 : index
      %c0_15 = arith.constant 0 : index
      %17 = vector.load %arg6[%c0_14, %c0_15] : memref<32x192xbf16, #tpu.memory_space<vmem>>, vector<32x192xbf16>
      tpu.vector_store %arg6[%c0_14, %c0_15], %16 {strides = array<i32>} : memref<32x192xbf16, #tpu.memory_space<vmem>>, vector<32x192xbf16>,
    } else {
    }
    return
  }
  func.func @transform_0(%arg0: i32, %arg1: i32, %arg2: i32) -> (i32, i32) {
    %c0_i32 = arith.constant 0 : i32
    return %arg0, %arg2 : i32, i32
  }
  func.func @transform_1(%arg0: i32, %arg1: i32, %arg2: i32) -> (i32, i32) {
    %c0_i32 = arith.constant 0 : i32
    return %arg2, %arg1 : i32, i32
  }
  func.func @transform_2(%arg0: i32, %arg1: i32, %arg2: i32) -> (i32, i32) {
    %c0_i32 = arith.constant 0 : i32
    %c0_i32_0 = arith.constant 0 : i32
    return %c0_i32, %arg1 : i32, i32
  }
  func.func @transform_3(%arg0: i32, %arg1: i32, %arg2: i32) -> (i32, i32) {
    %c0_i32 = arith.constant 0 : i32
    return %arg0, %arg1 : i32, i32
  }
}

module attributes {stable_mosaic.version = 11 : i64} {
  func.func @_rope_kernel(%arg0: i32, %arg1: i32, %arg2: memref<4x16x16xbf16, #tpu.memory_space<vmem>>, %arg3: memref<4x16x16xbf16, #tpu.memory_space<vmem>>, %arg4: memref<16x8xf32, #tpu.memory_space<vmem>>, %arg5: memref<16x8xf32, #tpu.memory_space<vmem>>, %arg6: memref<4x16x16xbf16, #tpu.memory_space<vmem>>, %arg7: memref<4x16x16xbf16, #tpu.memory_space<vmem>>) attributes {dimension_semantics = [#tpu.dimension_semantics<parallel>, #tpu.dimension_semantics<parallel>], iteration_bounds = array<i64: 2, 1>, scalar_prefetch = 0 : i64, scratch_operands = 0 : i64, tpu.core_type = #tpu.core_type<tc>, window_params = [{transform_indices = @transform_0, window_bounds = array<i64: 4, 16, 16>}, {transform_indices = @transform_1, window_bounds = array<i64: 4, 16, 16>}, {transform_indices = @transform_2, window_bounds = array<i64: 16, 8>}, {transform_indices = @transform_3, window_bounds = array<i64: 16, 8>}, {transform_indices = @transform_4, window_bounds = array<i64: 4, 16, 16>}, {transform_indices = @transform_5, window_bounds = array<i64: 4, 16, 16>}]} {
    %c0 = arith.constant 0 : index
    %c0_0 = arith.constant 0 : index
    %0 = vector.load %arg4[%c0, %c0_0] : memref<16x8xf32, #tpu.memory_space<vmem>>, vector<16x8xf32>
    %1 = vector.shape_cast %0 : vector<16x8xf32> to vector<1x16x8xf32>
    %c0_1 = arith.constant 0 : index
    %c0_2 = arith.constant 0 : index
    %2 = vector.load %arg5[%c0_1, %c0_2] : memref<16x8xf32, #tpu.memory_space<vmem>>, vector<16x8xf32>
    %3 = vector.shape_cast %2 : vector<16x8xf32> to vector<1x16x8xf32>
    %c0_3 = arith.constant 0 : index
    %c0_4 = arith.constant 0 : index
    %c0_5 = arith.constant 0 : index
    %4 = vector.load %arg2[%c0_3, %c0_4, %c0_5] : memref<4x16x16xbf16, #tpu.memory_space<vmem>>, vector<4x16x16xbf16>
    %5 = arith.extf %4 : vector<4x16x16xbf16> to vector<4x16x16xf32>
    %6 = vector.extract_strided_slice %5 {offsets = [0, 0, 0], sizes = [4, 16, 8], strides = [1, 1, 1]} : vector<4x16x16xf32> to vector<4x16x8xf32>
    %7 = vector.extract_strided_slice %5 {offsets = [0, 0, 8], sizes = [4, 16, 8], strides = [1, 1, 1]} : vector<4x16x16xf32> to vector<4x16x8xf32>
    %8 = vector.broadcast %1 : vector<1x16x8xf32> to vector<4x16x8xf32>
    %9 = arith.mulf %6, %8 : vector<4x16x8xf32>
    %10 = vector.broadcast %3 : vector<1x16x8xf32> to vector<4x16x8xf32>
    %11 = arith.mulf %7, %10 : vector<4x16x8xf32>
    %12 = arith.subf %9, %11 : vector<4x16x8xf32>
    %13 = vector.broadcast %1 : vector<1x16x8xf32> to vector<4x16x8xf32>
    %14 = arith.mulf %7, %13 : vector<4x16x8xf32>
    %15 = vector.broadcast %3 : vector<1x16x8xf32> to vector<4x16x8xf32>
    %16 = arith.mulf %6, %15 : vector<4x16x8xf32>
    %17 = arith.addf %14, %16 : vector<4x16x8xf32>
    %18 = tpu.concatenate %12, %17 in 2 : vector<4x16x8xf32>, vector<4x16x8xf32> -> vector<4x16x16xf32>
    %19 = arith.truncf %18 : vector<4x16x16xf32> to vector<4x16x16xbf16>
    %c0_6 = arith.constant 0 : index
    %c0_7 = arith.constant 0 : index
    %c0_8 = arith.constant 0 : index
    %20 = vector.load %arg6[%c0_6, %c0_7, %c0_8] : memref<4x16x16xbf16, #tpu.memory_space<vmem>>, vector<4x16x16xbf16>
    tpu.vector_store %arg6[%c0_6, %c0_7, %c0_8], %19 {strides = array<i32>} : memref<4x16x16xbf16, #tpu.memory_space<vmem>>, vector<4x16x16xbf16>,
    %c0_9 = arith.constant 0 : index
    %c0_10 = arith.constant 0 : index
    %c0_11 = arith.constant 0 : index
    %21 = vector.load %arg3[%c0_9, %c0_10, %c0_11] : memref<4x16x16xbf16, #tpu.memory_space<vmem>>, vector<4x16x16xbf16>
    %22 = arith.extf %21 : vector<4x16x16xbf16> to vector<4x16x16xf32>
    %23 = vector.extract_strided_slice %22 {offsets = [0, 0, 0], sizes = [4, 16, 8], strides = [1, 1, 1]} : vector<4x16x16xf32> to vector<4x16x8xf32>
    %24 = vector.extract_strided_slice %22 {offsets = [0, 0, 8], sizes = [4, 16, 8], strides = [1, 1, 1]} : vector<4x16x16xf32> to vector<4x16x8xf32>
    %25 = vector.broadcast %1 : vector<1x16x8xf32> to vector<4x16x8xf32>
    %26 = arith.mulf %23, %25 : vector<4x16x8xf32>
    %27 = vector.broadcast %3 : vector<1x16x8xf32> to vector<4x16x8xf32>
    %28 = arith.mulf %24, %27 : vector<4x16x8xf32>
    %29 = arith.subf %26, %28 : vector<4x16x8xf32>
    %30 = vector.broadcast %1 : vector<1x16x8xf32> to vector<4x16x8xf32>
    %31 = arith.mulf %24, %30 : vector<4x16x8xf32>
    %32 = vector.broadcast %3 : vector<1x16x8xf32> to vector<4x16x8xf32>
    %33 = arith.mulf %23, %32 : vector<4x16x8xf32>
    %34 = arith.addf %31, %33 : vector<4x16x8xf32>
    %35 = tpu.concatenate %29, %34 in 2 : vector<4x16x8xf32>, vector<4x16x8xf32> -> vector<4x16x16xf32>
    %36 = arith.truncf %35 : vector<4x16x16xf32> to vector<4x16x16xbf16>
    %c0_12 = arith.constant 0 : index
    %c0_13 = arith.constant 0 : index
    %c0_14 = arith.constant 0 : index
    %37 = vector.load %arg7[%c0_12, %c0_13, %c0_14] : memref<4x16x16xbf16, #tpu.memory_space<vmem>>, vector<4x16x16xbf16>
    tpu.vector_store %arg7[%c0_12, %c0_13, %c0_14], %36 {strides = array<i32>} : memref<4x16x16xbf16, #tpu.memory_space<vmem>>, vector<4x16x16xbf16>,
    return
  }
  func.func @transform_0(%arg0: i32, %arg1: i32) -> (i32, i32, i32) {
    %c0_i32 = arith.constant 0 : i32
    %c0_i32_0 = arith.constant 0 : i32
    return %arg0, %arg1, %c0_i32 : i32, i32, i32
  }
  func.func @transform_1(%arg0: i32, %arg1: i32) -> (i32, i32, i32) {
    %c0_i32 = arith.constant 0 : i32
    %c0_i32_0 = arith.constant 0 : i32
    return %arg0, %arg1, %c0_i32 : i32, i32, i32
  }
  func.func @transform_2(%arg0: i32, %arg1: i32) -> (i32, i32) {
    %c0_i32 = arith.constant 0 : i32
    %c0_i32_0 = arith.constant 0 : i32
    return %arg1, %c0_i32 : i32, i32
  }
  func.func @transform_3(%arg0: i32, %arg1: i32) -> (i32, i32) {
    %c0_i32 = arith.constant 0 : i32
    %c0_i32_0 = arith.constant 0 : i32
    return %arg1, %c0_i32 : i32, i32
  }
  func.func @transform_4(%arg0: i32, %arg1: i32) -> (i32, i32, i32) {
    %c0_i32 = arith.constant 0 : i32
    %c0_i32_0 = arith.constant 0 : i32
    return %arg0, %arg1, %c0_i32 : i32, i32, i32
  }
  func.func @transform_5(%arg0: i32, %arg1: i32) -> (i32, i32, i32) {
    %c0_i32 = arith.constant 0 : i32
    %c0_i32_0 = arith.constant 0 : i32
    return %arg0, %arg1, %c0_i32 : i32, i32, i32
  }
}

module attributes {stable_mosaic.version = 11 : i64} {
  func.func @_flash_attn_kernel(%arg0: i32, %arg1: i32, %arg2: i32, %arg3: memref<1x16x16xbf16, #tpu.memory_space<vmem>>, %arg4: memref<1x16x16xbf16, #tpu.memory_space<vmem>>, %arg5: memref<1x16x16xbf16, #tpu.memory_space<vmem>>, %arg6: memref<1x16x16xbf16, #tpu.memory_space<vmem>>, %arg7: memref<16x1xf32, #tpu.memory_space<vmem>>, %arg8: memref<16x1xf32, #tpu.memory_space<vmem>>, %arg9: memref<16x16xf32, #tpu.memory_space<vmem>>) attributes {dimension_semantics = [#tpu.dimension_semantics<parallel>, #tpu.dimension_semantics<parallel>, #tpu.dimension_semantics<arbitrary>], iteration_bounds = array<i64: 8, 1, 1>, scalar_prefetch = 0 : i64, scratch_operands = 3 : i64, tpu.core_type = #tpu.core_type<tc>, window_params = [{transform_indices = @transform_0, window_bounds = array<i64: 1, 16, 16>}, {transform_indices = @transform_1, window_bounds = array<i64: 1, 16, 16>}, {transform_indices = @transform_2, window_bounds = array<i64: 1, 16, 16>}, {transform_indices = @transform_3, window_bounds = array<i64: 1, 16, 16>}]} {
    %c0_i32 = arith.constant 0 : i32
    %0 = arith.cmpi eq, %arg2, %c0_i32 : i32
    %1 = arith.extui %0 : i1 to i32
    %c0_i32_0 = arith.constant 0 : i32
    %2 = arith.cmpi ne, %1, %c0_i32_0 : i32
    scf.if %2 {
      %cst_26 = arith.constant 0xFF800000 : f32
      %36 = vector.broadcast %cst_26 : f32 to vector<16x1xf32>
      %c0_27 = arith.constant 0 : index
      %c0_28 = arith.constant 0 : index
      %37 = vector.load %arg7[%c0_27, %c0_28] : memref<16x1xf32, #tpu.memory_space<vmem>>, vector<16x1xf32>
      tpu.vector_store %arg7[%c0_27, %c0_28], %36 {strides = array<i32>} : memref<16x1xf32, #tpu.memory_space<vmem>>, vector<16x1xf32>,
      %cst_29 = arith.constant 0.000000e+00 : f32
      %38 = vector.broadcast %cst_29 : f32 to vector<16x1xf32>
      %c0_30 = arith.constant 0 : index
      %c0_31 = arith.constant 0 : index
      %39 = vector.load %arg8[%c0_30, %c0_31] : memref<16x1xf32, #tpu.memory_space<vmem>>, vector<16x1xf32>
      tpu.vector_store %arg8[%c0_30, %c0_31], %38 {strides = array<i32>} : memref<16x1xf32, #tpu.memory_space<vmem>>, vector<16x1xf32>,
      %cst_32 = arith.constant 0.000000e+00 : f32
      %40 = vector.broadcast %cst_32 : f32 to vector<16x16xf32>
      %c0_33 = arith.constant 0 : index
      %c0_34 = arith.constant 0 : index
      %41 = vector.load %arg9[%c0_33, %c0_34] : memref<16x16xf32, #tpu.memory_space<vmem>>, vector<16x16xf32>
      tpu.vector_store %arg9[%c0_33, %c0_34], %40 {strides = array<i32>} : memref<16x16xf32, #tpu.memory_space<vmem>>, vector<16x16xf32>,
    } else {
    }
    %c0 = arith.constant 0 : index
    %c0_1 = arith.constant 0 : index
    %c0_2 = arith.constant 0 : index
    %3 = vector.load %arg3[%c0, %c0_1, %c0_2] : memref<1x16x16xbf16, #tpu.memory_space<vmem>>, vector<1x16x16xbf16>
    %4 = vector.shape_cast %3 : vector<1x16x16xbf16> to vector<16x16xbf16>
    %c0_3 = arith.constant 0 : index
    %c0_4 = arith.constant 0 : index
    %c0_5 = arith.constant 0 : index
    %5 = vector.load %arg4[%c0_3, %c0_4, %c0_5] : memref<1x16x16xbf16, #tpu.memory_space<vmem>>, vector<1x16x16xbf16>
    %6 = vector.shape_cast %5 : vector<1x16x16xbf16> to vector<16x16xbf16>
    %cst = arith.constant dense<0.000000e+00> : vector<16x16xf32>
    %7 = tpu.matmul %4, %6, %cst {dimension_numbers = #tpu.dot_dimension_numbers<[1], [1], [0], [0], [0, 0, 1, 0], [], []>} : vector<16x16xbf16>, vector<16x16xbf16>, vector<16x16xf32> -> vector<16x16xf32>
    %c0_6 = arith.constant 0 : index
    %c0_7 = arith.constant 0 : index
    %8 = vector.load %arg7[%c0_6, %c0_7] : memref<16x1xf32, #tpu.memory_space<vmem>>, vector<16x1xf32>
    %cst_8 = arith.constant dense<0xFF800000> : vector<16xf32>
    %9 = vector.multi_reduction <maximumf>, %7, %cst_8 [1] : vector<16x16xf32> to vector<16xf32>
    %10 = vector.shape_cast %9 : vector<16xf32> to vector<16x1xf32>
    %11 = arith.maximumf %8, %10 : vector<16x1xf32>
    %12 = arith.subf %8, %11 : vector<16x1xf32>
    %13 = math.exp %12 : vector<16x1xf32>
    %14 = vector.broadcast %11 : vector<16x1xf32> to vector<16x16xf32>
    %15 = arith.subf %7, %14 : vector<16x16xf32>
    %16 = math.exp %15 : vector<16x16xf32>
    %c0_9 = arith.constant 0 : index
    %c0_10 = arith.constant 0 : index
    %17 = vector.load %arg8[%c0_9, %c0_10] : memref<16x1xf32, #tpu.memory_space<vmem>>, vector<16x1xf32>
    %18 = arith.mulf %13, %17 : vector<16x1xf32>
    %cst_11 = arith.constant dense<0.000000e+00> : vector<16xf32>
    %19 = vector.multi_reduction <add>, %16, %cst_11 [1] : vector<16x16xf32> to vector<16xf32>
    %20 = vector.shape_cast %19 : vector<16xf32> to vector<16x1xf32>
    %21 = arith.addf %18, %20 : vector<16x1xf32>
    %c0_12 = arith.constant 0 : index
    %c0_13 = arith.constant 0 : index
    %22 = vector.load %arg8[%c0_12, %c0_13] : memref<16x1xf32, #tpu.memory_space<vmem>>, vector<16x1xf32>
    tpu.vector_store %arg8[%c0_12, %c0_13], %21 {strides = array<i32>} : memref<16x1xf32, #tpu.memory_space<vmem>>, vector<16x1xf32>,
    %c0_14 = arith.constant 0 : index
    %c0_15 = arith.constant 0 : index
    %23 = vector.load %arg9[%c0_14, %c0_15] : memref<16x16xf32, #tpu.memory_space<vmem>>, vector<16x16xf32>
    %24 = vector.broadcast %13 : vector<16x1xf32> to vector<16x16xf32>
    %25 = arith.mulf %24, %23 : vector<16x16xf32>
    %26 = arith.truncf %16 : vector<16x16xf32> to vector<16x16xbf16>
    %c0_16 = arith.constant 0 : index
    %c0_17 = arith.constant 0 : index
    %c0_18 = arith.constant 0 : index
    %27 = vector.load %arg5[%c0_16, %c0_17, %c0_18] : memref<1x16x16xbf16, #tpu.memory_space<vmem>>, vector<1x16x16xbf16>
    %28 = vector.shape_cast %27 : vector<1x16x16xbf16> to vector<16x16xbf16>
    %cst_19 = arith.constant dense<0.000000e+00> : vector<16x16xf32>
    %29 = tpu.matmul %26, %28, %cst_19 {dimension_numbers = #tpu.dot_dimension_numbers<[1], [0], [0], [1], [0, 0, 1, 1], [], []>} : vector<16x16xbf16>, vector<16x16xbf16>, vector<16x16xf32> -> vector<16x16xf32>
    %30 = arith.addf %25, %29 : vector<16x16xf32>
    %c0_20 = arith.constant 0 : index
    %c0_21 = arith.constant 0 : index
    %31 = vector.load %arg9[%c0_20, %c0_21] : memref<16x16xf32, #tpu.memory_space<vmem>>, vector<16x16xf32>
    tpu.vector_store %arg9[%c0_20, %c0_21], %30 {strides = array<i32>} : memref<16x16xf32, #tpu.memory_space<vmem>>, vector<16x16xf32>,
    %c0_22 = arith.constant 0 : index
    %c0_23 = arith.constant 0 : index
    %32 = vector.load %arg7[%c0_22, %c0_23] : memref<16x1xf32, #tpu.memory_space<vmem>>, vector<16x1xf32>
    tpu.vector_store %arg7[%c0_22, %c0_23], %11 {strides = array<i32>} : memref<16x1xf32, #tpu.memory_space<vmem>>, vector<16x1xf32>,
    %c0_i32_24 = arith.constant 0 : i32
    %33 = arith.cmpi eq, %arg2, %c0_i32_24 : i32
    %34 = arith.extui %33 : i1 to i32
    %c0_i32_25 = arith.constant 0 : i32
    %35 = arith.cmpi ne, %34, %c0_i32_25 : i32
    scf.if %35 {
      %c0_26 = arith.constant 0 : index
      %c0_27 = arith.constant 0 : index
      %36 = vector.load %arg9[%c0_26, %c0_27] : memref<16x16xf32, #tpu.memory_space<vmem>>, vector<16x16xf32>
      %c0_28 = arith.constant 0 : index
      %c0_29 = arith.constant 0 : index
      %37 = vector.load %arg8[%c0_28, %c0_29] : memref<16x1xf32, #tpu.memory_space<vmem>>, vector<16x1xf32>
      %38 = tpu.reciprocal %37 {approx = true} : vector<16x1xf32> -> vector<16x1xf32>
      %39 = vector.broadcast %38 : vector<16x1xf32> to vector<16x16xf32>
      %40 = arith.mulf %36, %39 : vector<16x16xf32>
      %41 = arith.truncf %40 : vector<16x16xf32> to vector<16x16xbf16>
      %c0_30 = arith.constant 0 : index
      %c0_31 = arith.constant 0 : index
      %c0_32 = arith.constant 0 : index
      %42 = vector.load %arg6[%c0_30, %c0_31, %c0_32] : memref<1x16x16xbf16, #tpu.memory_space<vmem>>, vector<1x16x16xbf16>
      %43 = vector.shape_cast %42 : vector<1x16x16xbf16> to vector<16x16xbf16>
      %44 = vector.shape_cast %41 : vector<16x16xbf16> to vector<1x16x16xbf16>
      tpu.vector_store %arg6[%c0_30, %c0_31, %c0_32], %44 {strides = array<i32>} : memref<1x16x16xbf16, #tpu.memory_space<vmem>>, vector<1x16x16xbf16>,
    } else {
    }
    return
  }
  func.func @transform_0(%arg0: i32, %arg1: i32, %arg2: i32) -> (i32, i32, i32) {
    %c0_i32 = arith.constant 0 : i32
    %c0_i32_0 = arith.constant 0 : i32
    return %arg0, %arg1, %c0_i32 : i32, i32, i32
  }
  func.func @transform_1(%arg0: i32, %arg1: i32, %arg2: i32) -> (i32, i32, i32) {
    %c0_i32 = arith.constant 0 : i32
    %c0_i32_0 = arith.constant 0 : i32
    return %arg0, %arg2, %c0_i32 : i32, i32, i32
  }
  func.func @transform_2(%arg0: i32, %arg1: i32, %arg2: i32) -> (i32, i32, i32) {
    %c0_i32 = arith.constant 0 : i32
    %c0_i32_0 = arith.constant 0 : i32
    return %arg0, %arg2, %c0_i32 : i32, i32, i32
  }
  func.func @transform_3(%arg0: i32, %arg1: i32, %arg2: i32) -> (i32, i32, i32) {
    %c0_i32 = arith.constant 0 : i32
    %c0_i32_0 = arith.constant 0 : i32
    return %arg0, %arg1, %c0_i32 : i32, i32, i32
  }
}

module attributes {stable_mosaic.version = 11 : i64} {
  func.func @_linear_bias_kernel(%arg0: i32, %arg1: i32, %arg2: i32, %arg3: memref<32x64xbf16, #tpu.memory_space<vmem>>, %arg4: memref<64x64xbf16, #tpu.memory_space<vmem>>, %arg5: memref<1x64xf32, #tpu.memory_space<vmem>>, %arg6: memref<32x64xf32, #tpu.memory_space<vmem>>, %arg7: memref<32x64xf32, #tpu.memory_space<vmem>>) attributes {dimension_semantics = [#tpu.dimension_semantics<parallel>, #tpu.dimension_semantics<parallel>, #tpu.dimension_semantics<arbitrary>], iteration_bounds = array<i64: 1, 1, 1>, scalar_prefetch = 0 : i64, scratch_operands = 1 : i64, tpu.core_type = #tpu.core_type<tc>, window_params = [{transform_indices = @transform_0, window_bounds = array<i64: 32, 64>}, {transform_indices = @transform_1, window_bounds = array<i64: 64, 64>}, {transform_indices = @transform_2, window_bounds = array<i64: 1, 64>}, {transform_indices = @transform_3, window_bounds = array<i64: 32, 64>}]} {
    %c0_i32 = arith.constant 0 : i32
    %0 = arith.cmpi eq, %arg2, %c0_i32 : i32
    %1 = arith.extui %0 : i1 to i32
    %c0_i32_0 = arith.constant 0 : i32
    %2 = arith.cmpi ne, %1, %c0_i32_0 : i32
    scf.if %2 {
      %cst_10 = arith.constant 0.000000e+00 : f32
      %12 = vector.broadcast %cst_10 : f32 to vector<32x64xf32>
      %c0_11 = arith.constant 0 : index
      %c0_12 = arith.constant 0 : index
      %13 = vector.load %arg7[%c0_11, %c0_12] : memref<32x64xf32, #tpu.memory_space<vmem>>, vector<32x64xf32>
      tpu.vector_store %arg7[%c0_11, %c0_12], %12 {strides = array<i32>} : memref<32x64xf32, #tpu.memory_space<vmem>>, vector<32x64xf32>,
    } else {
    }
    %c0 = arith.constant 0 : index
    %c0_1 = arith.constant 0 : index
    %3 = vector.load %arg7[%c0, %c0_1] : memref<32x64xf32, #tpu.memory_space<vmem>>, vector<32x64xf32>
    %c0_2 = arith.constant 0 : index
    %c0_3 = arith.constant 0 : index
    %4 = vector.load %arg3[%c0_2, %c0_3] : memref<32x64xbf16, #tpu.memory_space<vmem>>, vector<32x64xbf16>
    %c0_4 = arith.constant 0 : index
    %c0_5 = arith.constant 0 : index
    %5 = vector.load %arg4[%c0_4, %c0_5] : memref<64x64xbf16, #tpu.memory_space<vmem>>, vector<64x64xbf16>
    %cst = arith.constant dense<0.000000e+00> : vector<32x64xf32>
    %6 = tpu.matmul %4, %5, %cst {dimension_numbers = #tpu.dot_dimension_numbers<[1], [0], [0], [1], [0, 0, 1, 1], [], []>} : vector<32x64xbf16>, vector<64x64xbf16>, vector<32x64xf32> -> vector<32x64xf32>
    %7 = arith.addf %3, %6 : vector<32x64xf32>
    %c0_6 = arith.constant 0 : index
    %c0_7 = arith.constant 0 : index
    %8 = vector.load %arg7[%c0_6, %c0_7] : memref<32x64xf32, #tpu.memory_space<vmem>>, vector<32x64xf32>
    tpu.vector_store %arg7[%c0_6, %c0_7], %7 {strides = array<i32>} : memref<32x64xf32, #tpu.memory_space<vmem>>, vector<32x64xf32>,
    %c0_i32_8 = arith.constant 0 : i32
    %9 = arith.cmpi eq, %arg2, %c0_i32_8 : i32
    %10 = arith.extui %9 : i1 to i32
    %c0_i32_9 = arith.constant 0 : i32
    %11 = arith.cmpi ne, %10, %c0_i32_9 : i32
    scf.if %11 {
      %c0_10 = arith.constant 0 : index
      %c0_11 = arith.constant 0 : index
      %12 = vector.load %arg7[%c0_10, %c0_11] : memref<32x64xf32, #tpu.memory_space<vmem>>, vector<32x64xf32>
      %c0_12 = arith.constant 0 : index
      %c0_13 = arith.constant 0 : index
      %13 = vector.load %arg5[%c0_12, %c0_13] : memref<1x64xf32, #tpu.memory_space<vmem>>, vector<1x64xf32>
      %14 = vector.broadcast %13 : vector<1x64xf32> to vector<32x64xf32>
      %15 = arith.addf %12, %14 : vector<32x64xf32>
      %c0_14 = arith.constant 0 : index
      %c0_15 = arith.constant 0 : index
      %16 = vector.load %arg6[%c0_14, %c0_15] : memref<32x64xf32, #tpu.memory_space<vmem>>, vector<32x64xf32>
      tpu.vector_store %arg6[%c0_14, %c0_15], %15 {strides = array<i32>} : memref<32x64xf32, #tpu.memory_space<vmem>>, vector<32x64xf32>,
    } else {
    }
    return
  }
  func.func @transform_0(%arg0: i32, %arg1: i32, %arg2: i32) -> (i32, i32) {
    %c0_i32 = arith.constant 0 : i32
    return %arg0, %arg2 : i32, i32
  }
  func.func @transform_1(%arg0: i32, %arg1: i32, %arg2: i32) -> (i32, i32) {
    %c0_i32 = arith.constant 0 : i32
    return %arg2, %arg1 : i32, i32
  }
  func.func @transform_2(%arg0: i32, %arg1: i32, %arg2: i32) -> (i32, i32) {
    %c0_i32 = arith.constant 0 : i32
    %c0_i32_0 = arith.constant 0 : i32
    return %c0_i32, %arg1 : i32, i32
  }
  func.func @transform_3(%arg0: i32, %arg1: i32, %arg2: i32) -> (i32, i32) {
    %c0_i32 = arith.constant 0 : i32
    return %arg0, %arg1 : i32, i32
  }
}

</mosaic_0001>

<llo_original>
// kernel: multi_head_attention.5
$region0: #{multi_head_attention.5}
  #allocation0 [shape = 'u32[]', space=smem, size = 0x4, offset = 0x4, fixed_abs, tag = 'smem constant byte address 0x4 - core index']
  #allocation1 [shape = 'u32[72,128]{1,0:T(1,128)}', space=vmem, size = 0x9000, scoped, tag = 'internal scratch']
  %s0 = inlined_call_operand.vmem [shape: bf16[8,16,16], index: 0, kind: input, shape index: {}]
  %s1 = inlined_call_operand.vmem [shape: bf16[8,16,16], index: 1, kind: input, shape index: {}]
  %s2 = inlined_call_operand.vmem [shape: f32[16,8], index: 2, kind: input, shape index: {}]
  %s3 = inlined_call_operand.vmem [shape: f32[16,8], index: 3, kind: input, shape index: {}]
  %s4 = inlined_call_operand.vmem [shape: bf16[8,16,16], index: 4, kind: output, shape index: {0}]
  %s5 = inlined_call_operand.vmem [shape: bf16[8,16,16], index: 5, kind: output, shape index: {1}]
  %6 = xla_tuple %s4, %s5
  %s7 = sld [smem:[#allocation0]]
  $region57: #{multi_head_attention.5} parent=0
    _
  %s9 = ssub.s32 1, %s7
  %s10 = scalar_select 0, %s9, %s7
  loop: start=0, step=1, limit=4
  $region2: #{multi_head_attention.5} parent=0 // loop_pre_header
    _
  $region3: #{multi_head_attention.5} parent=0 // loop_header
    %s12 = sphi 0, %s16
    %p13 = scmp.ge.s32.totalorder %s12, 4
    %s19 = sphi 0, %s31
    %s20 = sphi 0, %s27
    %s21 = sphi 0, %s19
    %s22 = sphi 0, %s20
    %s23 = sphi 0, %s21
    %s24 = sphi 0, %s22
    %s36 = sphi 0, %s38
    %s39 = sphi 0, %s36
    %s40 = sphi 0, %s39
    %s56 = sphi 0, %s40
    %s64 = sphi 0, %s66
    %s67 = sphi 0, %s64
    %s68 = sphi 0, %s67
    %s84 = sphi 0, %s68
    %s90 = sphi 0, %s92
    %s93 = sphi 0, %s90
    %s94 = sphi 0, %s93
    %s110 = sphi 0, %s94
    %s116 = sphi 0, %s118
    %s119 = sphi 0, %s116
    %s120 = sphi 0, %s119
    %s136 = sphi 0, %s120
    %s144 = sphi 0, %s146
    %s147 = sphi 0, %s144
    %s148 = sphi 0, %s147
    %s164 = sphi 0, %s148
    %s172 = sphi 0, %s174
    %s175 = sphi 0, %s172
    %s176 = sphi 0, %s175
    %s192 = sphi 0, %s176
  $region4: #{multi_head_attention.5} parent=0 // loop_header_branch
    %15 = sbr.rel (%p13) target = $region8
  $region5: #{multi_head_attention.5} parent=0 // loop_body
    %s17 = ssub.s32 %s12, 1
    %s18 = ssub.s32 %s12, 2
    %s25 = sadd.s32 1, %s20
    %p26 = scmp.ge.s32.totalorder %s25, 1
    %s27 = scalar_select %p26, 0, %s25
    %s28 = sadd.s32 1, %s19
    %s29 = scalar_select %p26, %s28, %s19
    %p30 = scmp.ge.s32.totalorder %s29, 2
    %s31 = scalar_select %p30, 0, %s29
    %s32 = ssub.s32 %s19, %s31
    %s33 = ssub.s32 %s20, %s27
    %s34 = sor.u32 %s32, %s33
    %p35 = scmp.eq.s32.totalorder %s34, 0
    %s37 = sadd.s32 %s36, 1
    %s38 = scalar_select %p35, %s36, %s37
    %p41 = pneg %p35
    %p42 = scmp.eq.s32.totalorder %s12, 1
    %p43 = por %p41, %p42
    %p44 = scmp.ne.s32.totalorder %s36, %s39
    %p45 = scmp.eq.s32.totalorder %s12, 0
    %p46 = por %p44, %p45
    %p47 = scmp.ne.s32.totalorder %s36, %s39
    %p48 = scmp.eq.s32.totalorder %s17, 1
    %p49 = por %p47, %p48
    %p50 = scmp.ne.s32.totalorder %s39, %s40
    %p51 = scmp.eq.s32.totalorder %s17, 0
    %p52 = por %p50, %p51
    %p53 = scmp.ne.s32.totalorder %s39, %s40
    %p54 = scmp.eq.s32.totalorder %s18, 1
    %p55 = por %p53, %p54
    %p57 = scmp.ne.s32.totalorder %s40, %s56
    %p58 = scmp.eq.s32.totalorder %s18, 0
    %p59 = por %p57, %p58
    %s60 = ssub.s32 %s19, %s31
    %s61 = ssub.s32 %s20, %s27
    %s62 = sor.u32 %s60, %s61
    %p63 = scmp.eq.s32.totalorder %s62, 0
    %s65 = sadd.s32 %s64, 1
    %s66 = scalar_select %p63, %s64, %s65
    %p69 = pneg %p63
    %p70 = scmp.eq.s32.totalorder %s12, 1
    %p71 = por %p69, %p70
    %p72 = scmp.ne.s32.totalorder %s64, %s67
    %p73 = scmp.eq.s32.totalorder %s12, 0
    %p74 = por %p72, %p73
    %p75 = scmp.ne.s32.totalorder %s64, %s67
    %p76 = scmp.eq.s32.totalorder %s17, 1
    %p77 = por %p75, %p76
    %p78 = scmp.ne.s32.totalorder %s67, %s68
    %p79 = scmp.eq.s32.totalorder %s17, 0
    %p80 = por %p78, %p79
    %p81 = scmp.ne.s32.totalorder %s67, %s68
    %p82 = scmp.eq.s32.totalorder %s18, 1
    %p83 = por %p81, %p82
    %p85 = scmp.ne.s32.totalorder %s68, %s84
    %p86 = scmp.eq.s32.totalorder %s18, 0
    %p87 = por %p85, %p86
    %s88 = ssub.s32 %s20, %s27
    %p89 = scmp.eq.s32.totalorder %s88, 0
    %s91 = sadd.s32 %s90, 1
    %s92 = scalar_select %p89, %s90, %s91
    %p95 = pneg %p89
    %p96 = scmp.eq.s32.totalorder %s12, 1
    %p97 = por %p95, %p96
    %p98 = scmp.ne.s32.totalorder %s90, %s93
    %p99 = scmp.eq.s32.totalorder %s12, 0
    %p100 = por %p98, %p99
    %p101 = scmp.ne.s32.totalorder %s90, %s93
    %p102 = scmp.eq.s32.totalorder %s17, 1
    %p103 = por %p101, %p102
    %p104 = scmp.ne.s32.totalorder %s93, %s94
    %p105 = scmp.eq.s32.totalorder %s17, 0
    %p106 = por %p104, %p105
    %p107 = scmp.ne.s32.totalorder %s93, %s94
    %p108 = scmp.eq.s32.totalorder %s18, 1
    %p109 = por %p107, %p108
    %p111 = scmp.ne.s32.totalorder %s94, %s110
    %p112 = scmp.eq.s32.totalorder %s18, 0
    %p113 = por %p111, %p112
    %s114 = ssub.s32 %s20, %s27
    %p115 = scmp.eq.s32.totalorder %s114, 0
    %s117 = sadd.s32 %s116, 1
    %s118 = scalar_select %p115, %s116, %s117
    %p121 = pneg %p115
    %p122 = scmp.eq.s32.totalorder %s12, 1
    %p123 = por %p121, %p122
    %p124 = scmp.ne.s32.totalorder %s116, %s119
    %p125 = scmp.eq.s32.totalorder %s12, 0
    %p126 = por %p124, %p125
    %p127 = scmp.ne.s32.totalorder %s116, %s119
    %p128 = scmp.eq.s32.totalorder %s17, 1
    %p129 = por %p127, %p128
    %p130 = scmp.ne.s32.totalorder %s119, %s120
    %p131 = scmp.eq.s32.totalorder %s17, 0
    %p132 = por %p130, %p131
    %p133 = scmp.ne.s32.totalorder %s119, %s120
    %p134 = scmp.eq.s32.totalorder %s18, 1
    %p135 = por %p133, %p134
    %p137 = scmp.ne.s32.totalorder %s120, %s136
    %p138 = scmp.eq.s32.totalorder %s18, 0
    %p139 = por %p137, %p138
    %s140 = ssub.s32 %s19, %s31
    %s141 = ssub.s32 %s20, %s27
    %s142 = sor.u32 %s140, %s141
    %p143 = scmp.eq.s32.totalorder %s142, 0
    %s145 = sadd.s32 %s144, 1
    %s146 = scalar_select %p143, %s144, %s145
    %p149 = pneg %p143
    %p150 = scmp.eq.s32.totalorder %s12, 1
    %p151 = por %p149, %p150
    %p152 = scmp.ne.s32.totalorder %s144, %s147
    %p153 = scmp.eq.s32.totalorder %s12, 0
    %p154 = por %p152, %p153
    %p155 = scmp.ne.s32.totalorder %s144, %s147
    %p156 = scmp.eq.s32.totalorder %s17, 1
    %p157 = por %p155, %p156
    %p158 = scmp.ne.s32.totalorder %s147, %s148
    %p159 = scmp.eq.s32.totalorder %s17, 0
    %p160 = por %p158, %p159
    %p161 = scmp.ne.s32.totalorder %s147, %s148
    %p162 = scmp.eq.s32.totalorder %s18, 1
    %p163 = por %p161, %p162
    %p165 = scmp.ne.s32.totalorder %s148, %s164
    %p166 = scmp.eq.s32.totalorder %s18, 0
    %p167 = por %p165, %p166
    %s168 = ssub.s32 %s19, %s31
    %s169 = ssub.s32 %s20, %s27
    %s170 = sor.u32 %s168, %s169
    %p171 = scmp.eq.s32.totalorder %s170, 0
    %s173 = sadd.s32 %s172, 1
    %s174 = scalar_select %p171, %s172, %s173
    %p177 = pneg %p171
    %p178 = scmp.eq.s32.totalorder %s12, 1
    %p179 = por %p177, %p178
    %p180 = scmp.ne.s32.totalorder %s172, %s175
    %p181 = scmp.eq.s32.totalorder %s12, 0
    %p182 = por %p180, %p181
    %p183 = scmp.ne.s32.totalorder %s172, %s175
    %p184 = scmp.eq.s32.totalorder %s17, 1
    %p185 = por %p183, %p184
    %p186 = scmp.ne.s32.totalorder %s175, %s176
    %p187 = scmp.eq.s32.totalorder %s17, 0
    %p188 = por %p186, %p187
    %p189 = scmp.ne.s32.totalorder %s175, %s176
    %p190 = scmp.eq.s32.totalorder %s18, 1
    %p191 = por %p189, %p190
    %p193 = scmp.ne.s32.totalorder %s176, %s192
    %p194 = scmp.eq.s32.totalorder %s18, 0
    %p195 = por %p193, %p194
    %p196 = scmp.le.s32.totalorder 1, %s12
    %p197 = scmp.lt.s32.totalorder %s12, 3
    %p198 = pnand %p196, %p197
    %p199 = pneg %p198
    // Predicated region
    $region9: #{multi_head_attention.5} parent=5 // pred_check
      _
    $region10: #{multi_head_attention.5} parent=5 // pred_check_branch
      %201 = sbr.rel (%p198) target = $region12
    $region11: #{multi_head_attention.5} parent=5 // pred_region
      %s202 = ssub.s32 %s12, 1
      // Predicated region
      $region13: #{multi_head_attention.5} parent=11 // pred_check
        %p203 = pneg %p106
      $region14: #{multi_head_attention.5} parent=11 // pred_check_branch
        %205 = sbr.rel (%p203) target = $region16
      $region15: #{multi_head_attention.5} parent=11 // pred_region
        %s206 = smul.u32 2, %s22
        %p207 = scmp.lt.s32.totalorder %s206, 1
        %s208 = scalar_select %p207, %s206, 1
        %s209 = smul.addr %s208, 8
        %s210 = scalar_lea.vmem %s2, %s209
        %s211 = smul.u32 2, %s22
      $region16: #{multi_head_attention.5} parent=11 // pred_fallthru
        _
      // Predicated region
      $region17: #{multi_head_attention.5} parent=11 // pred_check
        %p212 = pneg %p132
      $region18: #{multi_head_attention.5} parent=11 // pred_check_branch
        %214 = sbr.rel (%p212) target = $region20
      $region19: #{multi_head_attention.5} parent=11 // pred_region
        %s215 = smul.u32 2, %s22
        %p216 = scmp.lt.s32.totalorder %s215, 1
        %s217 = scalar_select %p216, %s215, 1
        %s218 = smul.addr %s217, 8
        %s219 = scalar_lea.vmem %s3, %s218
        %s220 = smul.u32 2, %s22
      $region20: #{multi_head_attention.5} parent=11 // pred_fallthru
        _
    $region12: #{multi_head_attention.5} parent=5 // pred_fallthru
      _
    %p221 = scmp.lt.s32.totalorder %s12, 2
    // Predicated region
    $region21: #{multi_head_attention.5} parent=5 // pred_check
      %p222 = pneg %p221
    $region22: #{multi_head_attention.5} parent=5 // pred_check_branch
      %224 = sbr.rel (%p222) target = $region24
    $region23: #{multi_head_attention.5} parent=5 // pred_region
      // Predicated region
      $region25: #{multi_head_attention.5} parent=23 // pred_check
        %p225 = pneg %p46
      $region26: #{multi_head_attention.5} parent=23 // pred_check_branch
        %227 = sbr.rel (%p225) target = $region28
      $region27: #{multi_head_attention.5} parent=23 // pred_region
        %s228 = smul.u32 4, %s19
        %s229 = smul.u32 2, %s20
        %p230 = scmp.lt.s32.totalorder %s228, 7
        %s231 = scalar_select %p230, %s228, 7
        %p232 = scmp.lt.s32.totalorder %s229, 1
        %s233 = scalar_select %p232, %s229, 1
        %s234 = smul.addr %s231, 2
        %s235 = sadd.s32 %s233, %s234
        %s236 = smul.addr %s235, 4
        %s237 = scalar_lea.vmem %s0, %s236
        %s238 = smul.u32 4, %s19
        %s239 = smul.u32 2, %s20
      $region28: #{multi_head_attention.5} parent=23 // pred_fallthru
        _
      // Predicated region
      $region29: #{multi_head_attention.5} parent=23 // pred_check
        %p240 = pneg %p74
      $region30: #{multi_head_attention.5} parent=23 // pred_check_branch
        %242 = sbr.rel (%p240) target = $region32
      $region31: #{multi_head_attention.5} parent=23 // pred_region
        %s243 = smul.u32 4, %s19
        %s244 = smul.u32 2, %s20
        %p245 = scmp.lt.s32.totalorder %s243, 7
        %s246 = scalar_select %p245, %s243, 7
        %p247 = scmp.lt.s32.totalorder %s244, 1
        %s248 = scalar_select %p247, %s244, 1
        %s249 = smul.addr %s246, 2
        %s250 = sadd.s32 %s248, %s249
        %s251 = smul.addr %s250, 4
        %s252 = scalar_lea.vmem %s1, %s251
        %s253 = smul.u32 4, %s19
        %s254 = smul.u32 2, %s20
      $region32: #{multi_head_attention.5} parent=23 // pred_fallthru
        _
    $region24: #{multi_head_attention.5} parent=5 // pred_fallthru
      _
    %p255 = scmp.le.s32.totalorder 1, %s12
    %p256 = scmp.lt.s32.totalorder %s12, 3
    %p257 = pnand %p255, %p256
    %p258 = pneg %p257
    // Predicated region
    $region33: #{multi_head_attention.5} parent=5 // pred_check
      _
    $region34: #{multi_head_attention.5} parent=5 // pred_check_branch
      %260 = sbr.rel (%p257) target = $region36
    $region35: #{multi_head_attention.5} parent=5 // pred_region
      %s261 = ssub.s32 %s12, 1
      %s262 = smul.u32 4, %s21
      %s263 = smul.u32 2, %s22
      %p264 = scmp.lt.s32.totalorder %s262, 7
      %s265 = scalar_select %p264, %s262, 7
      %p266 = scmp.lt.s32.totalorder %s263, 1
      %s267 = scalar_select %p266, %s263, 1
      %s268 = smul.addr %s265, 2
      %s269 = sadd.s32 %s267, %s268
      %s270 = smul.addr %s269, 4
      %s271 = scalar_lea.vmem %s0, %s270
      %p272 = pneg %p52
      %p273 = pneg %p49
      %s274 = smul.u32 4, %s21
      %s275 = smul.u32 2, %s22
      %p276 = scmp.lt.s32.totalorder %s274, 7
      %s277 = scalar_select %p276, %s274, 7
      %p278 = scmp.lt.s32.totalorder %s275, 1
      %s279 = scalar_select %p278, %s275, 1
      %s280 = smul.addr %s277, 2
      %s281 = sadd.s32 %s279, %s280
      %s282 = smul.addr %s281, 4
      %s283 = scalar_lea.vmem %s1, %s282
      %p284 = pneg %p80
      %p285 = pneg %p77
      %s286 = smul.u32 2, %s22
      %p287 = scmp.lt.s32.totalorder %s286, 1
      %s288 = scalar_select %p287, %s286, 1
      %s289 = smul.addr %s288, 8
      %s290 = scalar_lea.vmem %s2, %s289
      %p291 = pneg %p106
      %p292 = pneg %p103
      %s293 = smul.u32 2, %s22
      %p294 = scmp.lt.s32.totalorder %s293, 1
      %s295 = scalar_select %p294, %s293, 1
      %s296 = smul.addr %s295, 8
      %s297 = scalar_lea.vmem %s3, %s296
      %p298 = pneg %p132
      %p299 = pneg %p129
      %p300 = pneg %p160
      %p301 = pneg %p157
      %s302 = smul.u32 4, %s21
      %s303 = smul.u32 2, %s22
      %p304 = scmp.lt.s32.totalorder %s302, 7
      %s305 = scalar_select %p304, %s302, 7
      %p306 = scmp.lt.s32.totalorder %s303, 1
      %s307 = scalar_select %p306, %s303, 1
      %s308 = smul.addr %s305, 2
      %s309 = sadd.s32 %s307, %s308
      %s310 = smul.addr %s309, 4
      %s311 = scalar_lea.vmem %s4, %s310
      %p312 = pneg %p188
      %p313 = pneg %p185
      %s314 = smul.u32 4, %s21
      %s315 = smul.u32 2, %s22
      %p316 = scmp.lt.s32.totalorder %s314, 7
      %s317 = scalar_select %p316, %s314, 7
      %p318 = scmp.lt.s32.totalorder %s315, 1
      %s319 = scalar_select %p318, %s315, 1
      %s320 = smul.addr %s317, 2
      %s321 = sadd.s32 %s319, %s320
      %s322 = smul.addr %s321, 4
      %s323 = scalar_lea.vmem %s5, %s322
      %s324 = smul.u32 4, %s21
      %s325 = smul.u32 2, %s22
      %p326 = scmp.lt.s32.totalorder %s324, 7
      %s327 = scalar_select %p326, %s324, 7
      %p328 = scmp.lt.s32.totalorder %s325, 1
      %s329 = scalar_select %p328, %s325, 1
      %s330 = smul.addr %s327, 2
      %s331 = sadd.s32 %s329, %s330
      %s332 = smul.addr %s331, 4
      %s333 = scalar_lea.vmem %s0, %s332
      %s334 = smul.u32 4, %s21
      %s335 = smul.u32 2, %s22
      %s336 = smul.u32 4, %s21
      %s337 = smul.u32 2, %s22
      %p338 = scmp.lt.s32.totalorder %s336, 7
      %s339 = scalar_select %p338, %s336, 7
      %p340 = scmp.lt.s32.totalorder %s337, 1
      %s341 = scalar_select %p340, %s337, 1
      %s342 = smul.addr %s339, 2
      %s343 = sadd.s32 %s341, %s342
      %s344 = smul.addr %s343, 4
      %s345 = scalar_lea.vmem %s1, %s344
      %s346 = smul.u32 4, %s21
      %s347 = smul.u32 2, %s22
      %s348 = smul.u32 2, %s22
      %p349 = scmp.lt.s32.totalorder %s348, 1
      %s350 = scalar_select %p349, %s348, 1
      %s351 = smul.addr %s350, 8
      %s352 = scalar_lea.vmem %s2, %s351
      %s353 = smul.u32 2, %s22
      %s354 = smul.u32 2, %s22
      %p355 = scmp.lt.s32.totalorder %s354, 1
      %s356 = scalar_select %p355, %s354, 1
      %s357 = smul.addr %s356, 8
      %s358 = scalar_lea.vmem %s3, %s357
      %s359 = smul.u32 2, %s22
      %s360 = smul.u32 4, %s21
      %s361 = smul.u32 2, %s22
      %p362 = scmp.lt.s32.totalorder %s360, 7
      %s363 = scalar_select %p362, %s360, 7
      %p364 = scmp.lt.s32.totalorder %s361, 1
      %s365 = scalar_select %p364, %s361, 1
      %s366 = smul.addr %s363, 2
      %s367 = sadd.s32 %s365, %s366
      %s368 = smul.addr %s367, 4
      %s369 = scalar_lea.vmem %s4, %s368
      %s370 = smul.u32 4, %s21
      %s371 = smul.u32 2, %s22
      %s372 = smul.u32 4, %s21
      %s373 = smul.u32 2, %s22
      %p374 = scmp.lt.s32.totalorder %s372, 7
      %s375 = scalar_select %p374, %s372, 7
      %p376 = scmp.lt.s32.totalorder %s373, 1
      %s377 = scalar_select %p376, %s373, 1
      %s378 = smul.addr %s375, 2
      %s379 = sadd.s32 %s377, %s378
      %s380 = smul.addr %s379, 4
      %s381 = scalar_lea.vmem %s5, %s380
      %s382 = smul.u32 4, %s21
      %s383 = smul.u32 2, %s22
      %v384 = vld [vmem:[%s352] sm:$0xff]
      %v385 = vld [vmem:[%s352 + $0x8] sm:$0xff]
      %v386 = vld [vmem:[%s358] sm:$0xff]
      %v387 = vld [vmem:[%s358 + $0x8] sm:$0xff]
      %v388 = vld [vmem:[%s333] sm:$0xf]
      %v389 = vld [vmem:[%s333 + $0x4] sm:$0xf]
      %v390 = vld [vmem:[%s333 + $0x8] sm:$0xf]
      %v391 = vld [vmem:[%s333 + $0xc] sm:$0xf]
      %v392 = vld [vmem:[%s333 + $0x10] sm:$0xf]
      %v393 = vld [vmem:[%s333 + $0x14] sm:$0xf]
      %v394 = vld [vmem:[%s333 + $0x18] sm:$0xf]
      %v395 = vld [vmem:[%s333 + $0x1c] sm:$0xf]
      %v396 = vunpack.c.l.bf16 %v388
      %v397 = vunpack.c.l.bf16 %v389
      %v398 = vunpack.c.l.bf16 %v390
      %v399 = vunpack.c.l.bf16 %v391
      %v400 = vunpack.c.l.bf16 %v392
      %v401 = vunpack.c.l.bf16 %v393
      %v402 = vunpack.c.l.bf16 %v394
      %v403 = vunpack.c.l.bf16 %v395
      %v404 = vmul.f32 %v396, %v384
      %v405 = vmul.f32 %v397, %v385
      %v406 = vmul.f32 %v398, %v384
      %v407 = vmul.f32 %v399, %v385
      %v408 = vmul.f32 %v400, %v384
      %v409 = vmul.f32 %v401, %v385
      %v410 = vmul.f32 %v402, %v384
      %v411 = vmul.f32 %v403, %v385
      %414 = vrot.lane.b32.xlu0 %v386, 8
      %v415 = vpop.permute.xlu0 %414
      %416 = vrot.lane.b32.xlu0 %v387, 8
      %v417 = vpop.permute.xlu0 %416
      %v420 = vmul.f32 %v396, %v415
      %v421 = vmul.f32 %v397, %v417
      %v422 = vmul.f32 %v398, %v415
      %v423 = vmul.f32 %v399, %v417
      %v424 = vmul.f32 %v400, %v415
      %v425 = vmul.f32 %v401, %v417
      %v426 = vmul.f32 %v402, %v415
      %v427 = vmul.f32 %v403, %v417
      %436 = vrot.lane.b32.xlu0 %v420, 120
      %v437 = vpop.permute.xlu0 %436
      %438 = vrot.lane.b32.xlu0 %v421, 120
      %v439 = vpop.permute.xlu0 %438
      %440 = vrot.lane.b32.xlu0 %v422, 120
      %v441 = vpop.permute.xlu0 %440
      %442 = vrot.lane.b32.xlu0 %v423, 120
      %v443 = vpop.permute.xlu0 %442
      %444 = vrot.lane.b32.xlu0 %v424, 120
      %v445 = vpop.permute.xlu0 %444
      %446 = vrot.lane.b32.xlu0 %v425, 120
      %v447 = vpop.permute.xlu0 %446
      %448 = vrot.lane.b32.xlu0 %v426, 120
      %v449 = vpop.permute.xlu0 %448
      %450 = vrot.lane.b32.xlu0 %v427, 120
      %v451 = vpop.permute.xlu0 %450
      %v460 = vsub.f32 %v404, %v437
      %v461 = vsub.f32 %v405, %v439
      %v462 = vsub.f32 %v406, %v441
      %v463 = vsub.f32 %v407, %v443
      %v464 = vsub.f32 %v408, %v445
      %v465 = vsub.f32 %v409, %v447
      %v466 = vsub.f32 %v410, %v449
      %v467 = vsub.f32 %v411, %v451
      %470 = vrot.lane.b32.xlu0 %v384, 8
      %v471 = vpop.permute.xlu0 %470
      %472 = vrot.lane.b32.xlu0 %v385, 8
      %v473 = vpop.permute.xlu0 %472
      %v476 = vmul.f32 %v396, %v471
      %v477 = vmul.f32 %v397, %v473
      %v478 = vmul.f32 %v398, %v471
      %v479 = vmul.f32 %v399, %v473
      %v480 = vmul.f32 %v400, %v471
      %v481 = vmul.f32 %v401, %v473
      %v482 = vmul.f32 %v402, %v471
      %v483 = vmul.f32 %v403, %v473
      %v484 = vmul.f32 %v396, %v386
      %v485 = vmul.f32 %v397, %v387
      %v486 = vmul.f32 %v398, %v386
      %v487 = vmul.f32 %v399, %v387
      %v488 = vmul.f32 %v400, %v386
      %v489 = vmul.f32 %v401, %v387
      %v490 = vmul.f32 %v402, %v386
      %v491 = vmul.f32 %v403, %v387
      %500 = vrot.lane.b32.xlu0 %v484, 8
      %v501 = vpop.permute.xlu0 %500
      %502 = vrot.lane.b32.xlu0 %v485, 8
      %v503 = vpop.permute.xlu0 %502
      %504 = vrot.lane.b32.xlu0 %v486, 8
      %v505 = vpop.permute.xlu0 %504
      %506 = vrot.lane.b32.xlu0 %v487, 8
      %v507 = vpop.permute.xlu0 %506
      %508 = vrot.lane.b32.xlu0 %v488, 8
      %v509 = vpop.permute.xlu0 %508
      %510 = vrot.lane.b32.xlu0 %v489, 8
      %v511 = vpop.permute.xlu0 %510
      %512 = vrot.lane.b32.xlu0 %v490, 8
      %v513 = vpop.permute.xlu0 %512
      %514 = vrot.lane.b32.xlu0 %v491, 8
      %v515 = vpop.permute.xlu0 %514
      %v524 = vadd.f32 %v476, %v501
      %v525 = vadd.f32 %v477, %v503
      %v526 = vadd.f32 %v478, %v505
      %v527 = vadd.f32 %v479, %v507
      %v528 = vadd.f32 %v480, %v509
      %v529 = vadd.f32 %v481, %v511
      %v530 = vadd.f32 %v482, %v513
      %v531 = vadd.f32 %v483, %v515
      %vm532 = vcmask 64512
      %v533 = vsel %vm532, %v460, %v524
      %v534 = vsel %vm532, %v461, %v525
      %v535 = vsel %vm532, %v462, %v526
      %v536 = vsel %vm532, %v463, %v527
      %v537 = vsel %vm532, %v464, %v528
      %v538 = vsel %vm532, %v465, %v529
      %v539 = vsel %vm532, %v466, %v530
      %v540 = vsel %vm532, %v467, %v531
      %v541 = vpack.c.bf16 %v533, %v533
      %v542 = vpack.c.bf16 %v534, %v534
      %v543 = vpack.c.bf16 %v535, %v535
      %v544 = vpack.c.bf16 %v536, %v536
      %v545 = vpack.c.bf16 %v537, %v537
      %v546 = vpack.c.bf16 %v538, %v538
      %v547 = vpack.c.bf16 %v539, %v539
      %v548 = vpack.c.bf16 %v540, %v540
      %vm549 = vcmask 125952
      %550 = vst.msk [vmem:[%s369] sm:$0xf] %vm549, %v541
      %551 = vst.msk [vmem:[%s369 + $0x4] sm:$0xf] %vm549, %v542
      %552 = vst.msk [vmem:[%s369 + $0x8] sm:$0xf] %vm549, %v543
      %553 = vst.msk [vmem:[%s369 + $0xc] sm:$0xf] %vm549, %v544
      %554 = vst.msk [vmem:[%s369 + $0x10] sm:$0xf] %vm549, %v545
      %555 = vst.msk [vmem:[%s369 + $0x14] sm:$0xf] %vm549, %v546
      %556 = vst.msk [vmem:[%s369 + $0x18] sm:$0xf] %vm549, %v547
      %557 = vst.msk [vmem:[%s369 + $0x1c] sm:$0xf] %vm549, %v548
      %v558 = vld [vmem:[%s345] sm:$0xf]
      %v559 = vld [vmem:[%s345 + $0x4] sm:$0xf]
      %v560 = vld [vmem:[%s345 + $0x8] sm:$0xf]
      %v561 = vld [vmem:[%s345 + $0xc] sm:$0xf]
      %v562 = vld [vmem:[%s345 + $0x10] sm:$0xf]
      %v563 = vld [vmem:[%s345 + $0x14] sm:$0xf]
      %v564 = vld [vmem:[%s345 + $0x18] sm:$0xf]
      %v565 = vld [vmem:[%s345 + $0x1c] sm:$0xf]
      %v566 = vunpack.c.l.bf16 %v558
      %v567 = vunpack.c.l.bf16 %v559
      %v568 = vunpack.c.l.bf16 %v560
      %v569 = vunpack.c.l.bf16 %v561
      %v570 = vunpack.c.l.bf16 %v562
      %v571 = vunpack.c.l.bf16 %v563
      %v572 = vunpack.c.l.bf16 %v564
      %v573 = vunpack.c.l.bf16 %v565
      %v574 = vmul.f32 %v566, %v384
      %v575 = vmul.f32 %v567, %v385
      %v576 = vmul.f32 %v568, %v384
      %v577 = vmul.f32 %v569, %v385
      %v578 = vmul.f32 %v570, %v384
      %v579 = vmul.f32 %v571, %v385
      %v580 = vmul.f32 %v572, %v384
      %v581 = vmul.f32 %v573, %v385
      %v582 = vmul.f32 %v566, %v415
      %v583 = vmul.f32 %v567, %v417
      %v584 = vmul.f32 %v568, %v415
      %v585 = vmul.f32 %v569, %v417
      %v586 = vmul.f32 %v570, %v415
      %v587 = vmul.f32 %v571, %v417
      %v588 = vmul.f32 %v572, %v415
      %v589 = vmul.f32 %v573, %v417
      %598 = vrot.lane.b32.xlu0 %v582, 120
      %v599 = vpop.permute.xlu0 %598
      %600 = vrot.lane.b32.xlu0 %v583, 120
      %v601 = vpop.permute.xlu0 %600
      %602 = vrot.lane.b32.xlu0 %v584, 120
      %v603 = vpop.permute.xlu0 %602
      %604 = vrot.lane.b32.xlu0 %v585, 120
      %v605 = vpop.permute.xlu0 %604
      %606 = vrot.lane.b32.xlu0 %v586, 120
      %v607 = vpop.permute.xlu0 %606
      %608 = vrot.lane.b32.xlu0 %v587, 120
      %v609 = vpop.permute.xlu0 %608
      %610 = vrot.lane.b32.xlu0 %v588, 120
      %v611 = vpop.permute.xlu0 %610
      %612 = vrot.lane.b32.xlu0 %v589, 120
      %v613 = vpop.permute.xlu0 %612
      %v622 = vsub.f32 %v574, %v599
      %v623 = vsub.f32 %v575, %v601
      %v624 = vsub.f32 %v576, %v603
      %v625 = vsub.f32 %v577, %v605
      %v626 = vsub.f32 %v578, %v607
      %v627 = vsub.f32 %v579, %v609
      %v628 = vsub.f32 %v580, %v611
      %v629 = vsub.f32 %v581, %v613
      %v630 = vmul.f32 %v566, %v471
      %v631 = vmul.f32 %v567, %v473
      %v632 = vmul.f32 %v568, %v471
      %v633 = vmul.f32 %v569, %v473
      %v634 = vmul.f32 %v570, %v471
      %v635 = vmul.f32 %v571, %v473
      %v636 = vmul.f32 %v572, %v471
      %v637 = vmul.f32 %v573, %v473
      %v638 = vmul.f32 %v566, %v386
      %v639 = vmul.f32 %v567, %v387
      %v640 = vmul.f32 %v568, %v386
      %v641 = vmul.f32 %v569, %v387
      %v642 = vmul.f32 %v570, %v386
      %v643 = vmul.f32 %v571, %v387
      %v644 = vmul.f32 %v572, %v386
      %v645 = vmul.f32 %v573, %v387
      %654 = vrot.lane.b32.xlu0 %v638, 8
      %v655 = vpop.permute.xlu0 %654
      %656 = vrot.lane.b32.xlu0 %v639, 8
      %v657 = vpop.permute.xlu0 %656
      %658 = vrot.lane.b32.xlu0 %v640, 8
      %v659 = vpop.permute.xlu0 %658
      %660 = vrot.lane.b32.xlu0 %v641, 8
      %v661 = vpop.permute.xlu0 %660
      %662 = vrot.lane.b32.xlu0 %v642, 8
      %v663 = vpop.permute.xlu0 %662
      %664 = vrot.lane.b32.xlu0 %v643, 8
      %v665 = vpop.permute.xlu0 %664
      %666 = vrot.lane.b32.xlu0 %v644, 8
      %v667 = vpop.permute.xlu0 %666
      %668 = vrot.lane.b32.xlu0 %v645, 8
      %v669 = vpop.permute.xlu0 %668
      %v678 = vadd.f32 %v630, %v655
      %v679 = vadd.f32 %v631, %v657
      %v680 = vadd.f32 %v632, %v659
      %v681 = vadd.f32 %v633, %v661
      %v682 = vadd.f32 %v634, %v663
      %v683 = vadd.f32 %v635, %v665
      %v684 = vadd.f32 %v636, %v667
      %v685 = vadd.f32 %v637, %v669
      %v686 = vsel %vm532, %v622, %v678
      %v687 = vsel %vm532, %v623, %v679
      %v688 = vsel %vm532, %v624, %v680
      %v689 = vsel %vm532, %v625, %v681
      %v690 = vsel %vm532, %v626, %v682
      %v691 = vsel %vm532, %v627, %v683
      %v692 = vsel %vm532, %v628, %v684
      %v693 = vsel %vm532, %v629, %v685
      %v694 = vpack.c.bf16 %v686, %v686
      %v695 = vpack.c.bf16 %v687, %v687
      %v696 = vpack.c.bf16 %v688, %v688
      %v697 = vpack.c.bf16 %v689, %v689
      %v698 = vpack.c.bf16 %v690, %v690
      %v699 = vpack.c.bf16 %v691, %v691
      %v700 = vpack.c.bf16 %v692, %v692
      %v701 = vpack.c.bf16 %v693, %v693
      %702 = vst.msk [vmem:[%s381] sm:$0xf] %vm549, %v694
      %703 = vst.msk [vmem:[%s381 + $0x4] sm:$0xf] %vm549, %v695
      %704 = vst.msk [vmem:[%s381 + $0x8] sm:$0xf] %vm549, %v696
      %705 = vst.msk [vmem:[%s381 + $0xc] sm:$0xf] %vm549, %v697
      %706 = vst.msk [vmem:[%s381 + $0x10] sm:$0xf] %vm549, %v698
      %707 = vst.msk [vmem:[%s381 + $0x14] sm:$0xf] %vm549, %v699
      %708 = vst.msk [vmem:[%s381 + $0x18] sm:$0xf] %vm549, %v700
      %709 = vst.msk [vmem:[%s381 + $0x1c] sm:$0xf] %vm549, %v701
      %s710 = smul.u32 4, %s21
      %s711 = smul.u32 2, %s22
      %p712 = scmp.lt.s32.totalorder %s710, 7
      %s713 = scalar_select %p712, %s710, 7
      %p714 = scmp.lt.s32.totalorder %s711, 1
      %s715 = scalar_select %p714, %s711, 1
      %s716 = smul.addr %s713, 2
      %s717 = sadd.s32 %s715, %s716
      %s718 = smul.addr %s717, 4
      %s719 = scalar_lea.vmem %s4, %s718
      %s720 = smul.u32 4, %s21
      %s721 = smul.u32 2, %s22
      %p722 = scmp.lt.s32.totalorder %s720, 7
      %s723 = scalar_select %p722, %s720, 7
      %p724 = scmp.lt.s32.totalorder %s721, 1
      %s725 = scalar_select %p724, %s721, 1
      %s726 = smul.addr %s723, 2
      %s727 = sadd.s32 %s725, %s726
      %s728 = smul.addr %s727, 4
      %s729 = scalar_lea.vmem %s5, %s728
      // Predicated region
      $region37: #{multi_head_attention.5} parent=35 // pred_check
        %p730 = pneg %p157
      $region38: #{multi_head_attention.5} parent=35 // pred_check_branch
        %732 = sbr.rel (%p730) target = $region40
      $region39: #{multi_head_attention.5} parent=35 // pred_region
        %s733 = smul.u32 4, %s21
        %s734 = smul.u32 2, %s22
      $region40: #{multi_head_attention.5} parent=35 // pred_fallthru
        _
      // Predicated region
      $region41: #{multi_head_attention.5} parent=35 // pred_check
        %p735 = pneg %p185
      $region42: #{multi_head_attention.5} parent=35 // pred_check_branch
        %737 = sbr.rel (%p735) target = $region44
      $region43: #{multi_head_attention.5} parent=35 // pred_region
        %s738 = smul.u32 4, %s21
        %s739 = smul.u32 2, %s22
      $region44: #{multi_head_attention.5} parent=35 // pred_fallthru
        _
    $region36: #{multi_head_attention.5} parent=5 // pred_fallthru
      _
    %p740 = scmp.le.s32.totalorder 2, %s12
    // Predicated region
    $region45: #{multi_head_attention.5} parent=5 // pred_check
      %p741 = pneg %p740
    $region46: #{multi_head_attention.5} parent=5 // pred_check_branch
      %743 = sbr.rel (%p741) target = $region48
    $region47: #{multi_head_attention.5} parent=5 // pred_region
      %s744 = ssub.s32 %s12, 2
      // Predicated region
      $region49: #{multi_head_attention.5} parent=47 // pred_check
        %p745 = pneg %p163
      $region50: #{multi_head_attention.5} parent=47 // pred_check_branch
        %747 = sbr.rel (%p745) target = $region52
      $region51: #{multi_head_attention.5} parent=47 // pred_region
        %s748 = smul.u32 4, %s23
        %s749 = smul.u32 2, %s24
        %p750 = scmp.lt.s32.totalorder %s748, 7
        %s751 = scalar_select %p750, %s748, 7
        %p752 = scmp.lt.s32.totalorder %s749, 1
        %s753 = scalar_select %p752, %s749, 1
        %s754 = smul.addr %s751, 2
        %s755 = sadd.s32 %s753, %s754
        %s756 = smul.addr %s755, 4
        %s757 = scalar_lea.vmem %s4, %s756
      $region52: #{multi_head_attention.5} parent=47 // pred_fallthru
        _
      // Predicated region
      $region53: #{multi_head_attention.5} parent=47 // pred_check
        %p758 = pneg %p191
      $region54: #{multi_head_attention.5} parent=47 // pred_check_branch
        %760 = sbr.rel (%p758) target = $region56
      $region55: #{multi_head_attention.5} parent=47 // pred_region
        %s761 = smul.u32 4, %s23
        %s762 = smul.u32 2, %s24
        %p763 = scmp.lt.s32.totalorder %s761, 7
        %s764 = scalar_select %p763, %s761, 7
        %p765 = scmp.lt.s32.totalorder %s762, 1
        %s766 = scalar_select %p765, %s762, 1
        %s767 = smul.addr %s764, 2
        %s768 = sadd.s32 %s766, %s767
        %s769 = smul.addr %s768, 4
        %s770 = scalar_lea.vmem %s5, %s769
      $region56: #{multi_head_attention.5} parent=47 // pred_fallthru
        _
    $region48: #{multi_head_attention.5} parent=5 // pred_fallthru
      _
  $region6: #{multi_head_attention.5} parent=0 // loop_footer
    %s16 = sadd.s32 1, %s12
  $region7: #{multi_head_attention.5} parent=0 // loop_footer_branch
    %11 = sbr.rel target = $region3
  $region8: #{multi_head_attention.5} parent=0 // loop_exit
    _

// kernel: multi_head_attention.4
$region0: #{multi_head_attention.4}
  #allocation0 [shape = 'u32[]', space=smem, size = 0x4, offset = 0x4, fixed_abs, tag = 'smem constant byte address 0x4 - core index']
  #allocation1 [shape = 'u32[72,128]{1,0:T(1,128)}', space=vmem, size = 0x9000, scoped, tag = 'internal scratch']
  #allocation2 [shape = 'f32[32,192]{1,0:T(8,128)}', space=vmem, size = 0x8000, scoped, tag = 'scratch operand']
  %s0 = inlined_call_operand.vmem [shape: bf16[32,64], index: 0, kind: input, shape index: {}]
  %s1 = inlined_call_operand.hbm [shape: bf16[64,192], index: 1, kind: input, shape index: {}]
  %s2 = inlined_call_operand.vmem [shape: f32[1,192], index: 2, kind: input, shape index: {}]
  %s3 = inlined_call_operand.vmem [shape: bf16[32,192], index: 3, kind: output, shape index: {}]
  %s4 = sld [smem:[#allocation0]]
  $region34: #{multi_head_attention.4} parent=0
    _
  %s6 = ssub.s32 1, %s4
  %s7 = scalar_select 0, %s6, %s4
  $region1: #{multi_head_attention.4} parent=0
    #allocation3 [shape = 'u8[32768]{0}', space=vmem, size = 0x8000, scoped, tag = 'input window, operand 1, single buffered']
    #allocation4 [shape = 's32[1]{0}', space=sflag, size = 0x4, scoped, tag = 'scoped memory for multi_head_attention.4']
    %8 = vsyncpa [#allocation4], 0
    // Predicated region
    $region2: #{multi_head_attention.4} parent=1 // pred_check
      _
    $region3: #{multi_head_attention.4} parent=1 // pred_check_branch
      %10 = sbr.rel (0) target = $region5
    $region4: #{multi_head_attention.4} parent=1 // pred_region
      _
    $region5: #{multi_head_attention.4} parent=1 // pred_fallthru
      _
    // Predicated region
    $region6: #{multi_head_attention.4} parent=1 // pred_check
      _
    $region7: #{multi_head_attention.4} parent=1 // pred_check_branch
      %12 = sbr.rel (0) target = $region9
    $region8: #{multi_head_attention.4} parent=1 // pred_region
      %14 = vsyncadd [#allocation4], 0
      %s15 = sshll.u32 %s1, 4
      %s16 = int_to_ptr.hbm [resolvable:$true] %s15
      %s17 = sshll.u32 [#allocation3], 4
      %s18 = int_to_ptr.vmem [resolvable:$true] %s17
      %23 = dma.hbm_to_vmem [thread:$0]  %s16, 1024, %s18, [#allocation4], 128, 128, 8
    $region9: #{multi_head_attention.4} parent=1 // pred_fallthru
      _
    // Predicated region
    $region10: #{multi_head_attention.4} parent=1 // pred_check
      _
    $region11: #{multi_head_attention.4} parent=1 // pred_check_branch
      %25 = sbr.rel (0) target = $region13
    $region12: #{multi_head_attention.4} parent=1 // pred_region
      _
    $region13: #{multi_head_attention.4} parent=1 // pred_fallthru
      _
    // Predicated region
    $region14: #{multi_head_attention.4} parent=1 // pred_check
      _
    $region15: #{multi_head_attention.4} parent=1 // pred_check_branch
      %27 = sbr.rel (0) target = $region17
    $region16: #{multi_head_attention.4} parent=1 // pred_region
      %29 = dma.done [#allocation4], 1024
    $region17: #{multi_head_attention.4} parent=1 // pred_fallthru
      _
    %p31 = scmp.eq.s32.totalorder 0, 0
    // Predicated region
    $region18: #{multi_head_attention.4} parent=1 // pred_check
      %p32 = pneg %p31
    $region19: #{multi_head_attention.4} parent=1 // pred_check_branch
      %34 = sbr.rel (%p32) target = $region21
    $region20: #{multi_head_attention.4} parent=1 // pred_region
      %35 = vst [vmem:[#allocation2] sm:$0xff] 0.0
      %vm36 = vcmask 523264
      %37 = vst.msk [vmem:[#allocation2 + $0x8] sm:$0xff] %vm36, 0.0
      %38 = vst [vmem:[#allocation2 + $0x10] sm:$0xff] 0.0
      %39 = vst.msk [vmem:[#allocation2 + $0x18] sm:$0xff] %vm36, 0.0
      %40 = vst [vmem:[#allocation2 + $0x20] sm:$0xff] 0.0
      %41 = vst.msk [vmem:[#allocation2 + $0x28] sm:$0xff] %vm36, 0.0
      %42 = vst [vmem:[#allocation2 + $0x30] sm:$0xff] 0.0
      %43 = vst.msk [vmem:[#allocation2 + $0x38] sm:$0xff] %vm36, 0.0
    $region21: #{multi_head_attention.4} parent=1 // pred_fallthru
      _
    %v44 = vld [vmem:[#allocation2] sm:$0xff]
    %v45 = vld [vmem:[#allocation2 + $0x8] sm:$0xff]
    %v46 = vld [vmem:[#allocation2 + $0x10] sm:$0xff]
    %v47 = vld [vmem:[#allocation2 + $0x18] sm:$0xff]
    %v48 = vld [vmem:[#allocation2 + $0x20] sm:$0xff]
    %v49 = vld [vmem:[#allocation2 + $0x28] sm:$0xff]
    %v50 = vld [vmem:[#allocation2 + $0x30] sm:$0xff]
    %v51 = vld [vmem:[#allocation2 + $0x38] sm:$0xff]
    %v52 = vld [vmem:[%s0] sm:$0xf]
    %v53 = vld [vmem:[%s0 + $0x4] sm:$0xf]
    %v54 = vld [vmem:[%s0 + $0x8] sm:$0xf]
    %v55 = vld [vmem:[%s0 + $0xc] sm:$0xf]
    %v56 = vld [vmem:[#allocation3] sm:$0xff]
    %v57 = vld [vmem:[#allocation3 + $0x8] sm:$0xff]
    %v58 = vld [vmem:[#allocation3 + $0x10] sm:$0xff]
    %v59 = vld [vmem:[#allocation3 + $0x18] sm:$0xff]
    %v60 = vld [vmem:[#allocation3 + $0x20] sm:$0xff]
    %v61 = vld [vmem:[#allocation3 + $0x28] sm:$0xff]
    %v62 = vld [vmem:[#allocation3 + $0x30] sm:$0xff]
    %v63 = vld [vmem:[#allocation3 + $0x38] sm:$0xff]
    %v68 = vunpack.c.l.b16 %v52
    %v69 = vunpack.c.l.b16 %v53
    %v70 = vunpack.c.l.b16 %v54
    %v71 = vunpack.c.l.b16 %v55
    %v72 = vpack.c.b16 %v69, %v68
    %v73 = vpack.c.b16 %v71, %v70
    %v82 = vunpack.c.l.b16 %v56
    %v83 = vunpack.c.h.b16 %v56
    %v84 = vunpack.c.l.b16 %v57
    %v85 = vunpack.c.h.b16 %v57
    %v86 = vunpack.c.l.b16 %v58
    %v87 = vunpack.c.h.b16 %v58
    %v88 = vunpack.c.l.b16 %v59
    %v89 = vunpack.c.h.b16 %v59
    %v90 = vunpack.c.l.b16 %v60
    %v91 = vunpack.c.h.b16 %v60
    %v92 = vunpack.c.l.b16 %v61
    %v93 = vunpack.c.h.b16 %v61
    %v94 = vunpack.c.l.b16 %v62
    %v95 = vunpack.c.h.b16 %v62
    %v96 = vunpack.c.l.b16 %v63
    %v97 = vunpack.c.h.b16 %v63
    %v98 = vpack.c.b16 %v84, %v82
    %v99 = vpack.c.b16 %v85, %v83
    %v100 = vpack.c.b16 %v88, %v86
    %v101 = vpack.c.b16 %v89, %v87
    %v102 = vpack.c.b16 %v92, %v90
    %v103 = vpack.c.b16 %v93, %v91
    %v104 = vpack.c.b16 %v96, %v94
    %v105 = vpack.c.b16 %v97, %v95
    %vm114 = vcmask 523264
    %v116 = vsel %vm114, %v72, 0
    %v119 = vsel %vm114, %v73, 0
    %121 = vmatpush.bf16.msra.mxu0 0
    %122 = vmatpush.bf16.msra.mxu0 0
    %123 = vmatpush.bf16.msra.mxu0 0
    %124 = vmatpush.bf16.msra.mxu0 0
    %125 = vmatpush.bf16.msra.mxu0 %v104
    %126 = vmatpush.bf16.msra.mxu0 %v102
    %127 = vmatpush.bf16.msra.mxu0 %v100
    %128 = vmatpush.bf16.msra.mxu0 %v98
    %129 = vmatmul.bf16.gmra.mxu0 %v116
    %v130 = vpop.f32.mrf.mxu0
    %v131 = vadd.f32 0.0, %v130
    %v132 = vpop.f32.mrf.mxu0
    %v133 = vadd.f32 0.0, %v132
    %134 = vmatmul.bf16.gmra.mxu0 %v119
    %v135 = vpop.f32.mrf.mxu0
    %v136 = vadd.f32 0.0, %v135
    %v137 = vpop.f32.mrf.mxu0
    %v138 = vadd.f32 0.0, %v137
    %139 = vdwg.mxu0
    %140 = vmatpush.bf16.msra.mxu0 0
    %141 = vmatpush.bf16.msra.mxu0 0
    %142 = vmatpush.bf16.msra.mxu0 0
    %143 = vmatpush.bf16.msra.mxu0 0
    %144 = vmatpush.bf16.msra.mxu0 %v105
    %145 = vmatpush.bf16.msra.mxu0 %v103
    %146 = vmatpush.bf16.msra.mxu0 %v101
    %147 = vmatpush.bf16.msra.mxu0 %v99
    %148 = vmatmul.bf16.gmra.mxu0 %v116
    %v149 = vpop.f32.mrf.mxu0
    %v150 = vadd.f32 0.0, %v149
    %v151 = vpop.f32.mrf.mxu0
    %v152 = vadd.f32 0.0, %v151
    %153 = vmatmul.bf16.gmra.mxu0 %v119
    %v154 = vpop.f32.mrf.mxu0
    %v155 = vadd.f32 0.0, %v154
    %v156 = vpop.f32.mrf.mxu0
    %v157 = vadd.f32 0.0, %v156
    %158 = vdwg.mxu0
    %v159 = vadd.f32 %v44, %v131
    %v160 = vadd.f32 %v45, %v150
    %v161 = vadd.f32 %v46, %v133
    %v162 = vadd.f32 %v47, %v152
    %v163 = vadd.f32 %v48, %v136
    %v164 = vadd.f32 %v49, %v155
    %v165 = vadd.f32 %v50, %v138
    %v166 = vadd.f32 %v51, %v157
    %167 = vst [vmem:[#allocation2] sm:$0xff] %v159
    %168 = vst.msk [vmem:[#allocation2 + $0x8] sm:$0xff] %vm114, %v160
    %169 = vst [vmem:[#allocation2 + $0x10] sm:$0xff] %v161
    %170 = vst.msk [vmem:[#allocation2 + $0x18] sm:$0xff] %vm114, %v162
    %171 = vst [vmem:[#allocation2 + $0x20] sm:$0xff] %v163
    %172 = vst.msk [vmem:[#allocation2 + $0x28] sm:$0xff] %vm114, %v164
    %173 = vst [vmem:[#allocation2 + $0x30] sm:$0xff] %v165
    %174 = vst.msk [vmem:[#allocation2 + $0x38] sm:$0xff] %vm114, %v166
    // Predicated region
    $region22: #{multi_head_attention.4} parent=1 // pred_check
      %p175 = pneg %p31
    $region23: #{multi_head_attention.4} parent=1 // pred_check_branch
      %177 = sbr.rel (%p175) target = $region25
    $region24: #{multi_head_attention.4} parent=1 // pred_region
      %v178 = vld [vmem:[#allocation2] sm:$0xff]
      %v179 = vld [vmem:[#allocation2 + $0x8] sm:$0xff]
      %v180 = vld [vmem:[#allocation2 + $0x10] sm:$0xff]
      %v181 = vld [vmem:[#allocation2 + $0x18] sm:$0xff]
      %v182 = vld [vmem:[#allocation2 + $0x20] sm:$0xff]
      %v183 = vld [vmem:[#allocation2 + $0x28] sm:$0xff]
      %v184 = vld [vmem:[#allocation2 + $0x30] sm:$0xff]
      %v185 = vld [vmem:[#allocation2 + $0x38] sm:$0xff]
      %v186 = vld [vmem:[%s2] sm:$0x3]
      %v188 = vperm.slane %v186, 0
      %v189 = vperm.slane %v186, 1
      %v192 = vadd.f32 %v178, %v188
      %v193 = vadd.f32 %v179, %v189
      %v194 = vadd.f32 %v180, %v188
      %v195 = vadd.f32 %v181, %v189
      %v196 = vadd.f32 %v182, %v188
      %v197 = vadd.f32 %v183, %v189
      %v198 = vadd.f32 %v184, %v188
      %v199 = vadd.f32 %v185, %v189
      %v200 = vpack.c.bf16 %v193, %v192
      %v201 = vpack.c.bf16 %v195, %v194
      %v202 = vpack.c.bf16 %v197, %v196
      %v203 = vpack.c.bf16 %v199, %v198
      %vm204 = vcmask 1043456
      %vm205 = vcmask 523268
      %vm206 = vmor %vm205, %vm204
      %207 = vst.msk [vmem:[%s3] sm:$0xff] %vm206, %v200
      %208 = vst.msk [vmem:[%s3 + $0x8] sm:$0xff] %vm206, %v201
      %209 = vst.msk [vmem:[%s3 + $0x10] sm:$0xff] %vm206, %v202
      %210 = vst.msk [vmem:[%s3 + $0x18] sm:$0xff] %vm206, %v203
    $region25: #{multi_head_attention.4} parent=1 // pred_fallthru
      _
    // Predicated region
    $region26: #{multi_head_attention.4} parent=1 // pred_check
      _
    $region27: #{multi_head_attention.4} parent=1 // pred_check_branch
      %212 = sbr.rel (0) target = $region29
    $region28: #{multi_head_attention.4} parent=1 // pred_region
      _
    $region29: #{multi_head_attention.4} parent=1 // pred_fallthru
      _
    // Predicated region
    $region30: #{multi_head_attention.4} parent=1 // pred_check
      _
    $region31: #{multi_head_attention.4} parent=1 // pred_check_branch
      %214 = sbr.rel (0) target = $region33
    $region32: #{multi_head_attention.4} parent=1 // pred_region
      _
    $region33: #{multi_head_attention.4} parent=1 // pred_fallthru
      _
    %215 = vsyncpa [#allocation4], 1

// kernel: multi_head_attention.6
$region0: #{multi_head_attention.6}
  #allocation0 [shape = 'u32[]', space=smem, size = 0x4, offset = 0x4, fixed_abs, tag = 'smem constant byte address 0x4 - core index']
  #allocation1 [shape = 'u32[72,128]{1,0:T(1,128)}', space=vmem, size = 0x9000, scoped, tag = 'internal scratch']
  #allocation2 [shape = 'f32[16,1]{1,0:T(8,128)}', space=vmem, size = 0x2000, scoped, tag = 'scratch operand']
  #allocation3 [shape = 'f32[16,1]{1,0:T(8,128)}', space=vmem, size = 0x2000, scoped, tag = 'scratch operand']
  #allocation4 [shape = 'f32[16,16]{1,0:T(8,128)}', space=vmem, size = 0x2000, scoped, tag = 'scratch operand']
  %s0 = inlined_call_operand.vmem [shape: bf16[8,16,16], index: 0, kind: input, shape index: {}]
  %s1 = inlined_call_operand.vmem [shape: bf16[8,16,16], index: 1, kind: input, shape index: {}]
  %s2 = inlined_call_operand.vmem [shape: bf16[8,16,16], index: 2, kind: input, shape index: {}]
  %s3 = inlined_call_operand.vmem [shape: bf16[8,16,16], index: 3, kind: output, shape index: {}]
  %s4 = sld [smem:[#allocation0]]
  $region53: #{multi_head_attention.6} parent=0
    _
  %s6 = ssub.s32 1, %s4
  %s7 = scalar_select 0, %s6, %s4
  loop: start=0, step=1, limit=10
  $region2: #{multi_head_attention.6} parent=0 // loop_pre_header
    _
  $region3: #{multi_head_attention.6} parent=0 // loop_header
    %s9 = sphi 0, %s13
    %p10 = scmp.ge.s32.totalorder %s9, 10
    %s16 = sphi 0, %s35
    %s17 = sphi 0, %s31
    %s18 = sphi 0, %s27
    %s19 = sphi 0, %s16
    %s20 = sphi 0, %s17
    %s21 = sphi 0, %s18
    %s22 = sphi 0, %s19
    %s23 = sphi 0, %s20
    %s24 = sphi 0, %s21
    %s40 = sphi 0, %s42
    %s43 = sphi 0, %s40
    %s44 = sphi 0, %s43
    %s60 = sphi 0, %s44
    %s68 = sphi 0, %s70
    %s71 = sphi 0, %s68
    %s72 = sphi 0, %s71
    %s88 = sphi 0, %s72
    %s96 = sphi 0, %s98
    %s99 = sphi 0, %s96
    %s100 = sphi 0, %s99
    %s116 = sphi 0, %s100
    %s124 = sphi 0, %s126
    %s127 = sphi 0, %s124
    %s128 = sphi 0, %s127
    %s144 = sphi 0, %s128
  $region4: #{multi_head_attention.6} parent=0 // loop_header_branch
    %12 = sbr.rel (%p10) target = $region8
  $region5: #{multi_head_attention.6} parent=0 // loop_body
    %s14 = ssub.s32 %s9, 1
    %s15 = ssub.s32 %s9, 2
    %s25 = sadd.s32 1, %s18
    %p26 = scmp.ge.s32.totalorder %s25, 1
    %s27 = scalar_select %p26, 0, %s25
    %s28 = sadd.s32 1, %s17
    %s29 = scalar_select %p26, %s28, %s17
    %p30 = scmp.ge.s32.totalorder %s29, 1
    %s31 = scalar_select %p30, 0, %s29
    %s32 = sadd.s32 1, %s16
    %s33 = scalar_select %p30, %s32, %s16
    %p34 = scmp.ge.s32.totalorder %s33, 8
    %s35 = scalar_select %p34, 0, %s33
    %s36 = ssub.s32 %s16, %s35
    %s37 = ssub.s32 %s17, %s31
    %s38 = sor.u32 %s36, %s37
    %p39 = scmp.eq.s32.totalorder %s38, 0
    %s41 = sadd.s32 %s40, 1
    %s42 = scalar_select %p39, %s40, %s41
    %p45 = pneg %p39
    %p46 = scmp.eq.s32.totalorder %s9, 7
    %p47 = por %p45, %p46
    %p48 = scmp.ne.s32.totalorder %s40, %s43
    %p49 = scmp.eq.s32.totalorder %s9, 0
    %p50 = por %p48, %p49
    %p51 = scmp.ne.s32.totalorder %s40, %s43
    %p52 = scmp.eq.s32.totalorder %s14, 7
    %p53 = por %p51, %p52
    %p54 = scmp.ne.s32.totalorder %s43, %s44
    %p55 = scmp.eq.s32.totalorder %s14, 0
    %p56 = por %p54, %p55
    %p57 = scmp.ne.s32.totalorder %s43, %s44
    %p58 = scmp.eq.s32.totalorder %s15, 7
    %p59 = por %p57, %p58
    %p61 = scmp.ne.s32.totalorder %s44, %s60
    %p62 = scmp.eq.s32.totalorder %s15, 0
    %p63 = por %p61, %p62
    %s64 = ssub.s32 %s16, %s35
    %s65 = ssub.s32 %s18, %s27
    %s66 = sor.u32 %s64, %s65
    %p67 = scmp.eq.s32.totalorder %s66, 0
    %s69 = sadd.s32 %s68, 1
    %s70 = scalar_select %p67, %s68, %s69
    %p73 = pneg %p67
    %p74 = scmp.eq.s32.totalorder %s9, 7
    %p75 = por %p73, %p74
    %p76 = scmp.ne.s32.totalorder %s68, %s71
    %p77 = scmp.eq.s32.totalorder %s9, 0
    %p78 = por %p76, %p77
    %p79 = scmp.ne.s32.totalorder %s68, %s71
    %p80 = scmp.eq.s32.totalorder %s14, 7
    %p81 = por %p79, %p80
    %p82 = scmp.ne.s32.totalorder %s71, %s72
    %p83 = scmp.eq.s32.totalorder %s14, 0
    %p84 = por %p82, %p83
    %p85 = scmp.ne.s32.totalorder %s71, %s72
    %p86 = scmp.eq.s32.totalorder %s15, 7
    %p87 = por %p85, %p86
    %p89 = scmp.ne.s32.totalorder %s72, %s88
    %p90 = scmp.eq.s32.totalorder %s15, 0
    %p91 = por %p89, %p90
    %s92 = ssub.s32 %s16, %s35
    %s93 = ssub.s32 %s18, %s27
    %s94 = sor.u32 %s92, %s93
    %p95 = scmp.eq.s32.totalorder %s94, 0
    %s97 = sadd.s32 %s96, 1
    %s98 = scalar_select %p95, %s96, %s97
    %p101 = pneg %p95
    %p102 = scmp.eq.s32.totalorder %s9, 7
    %p103 = por %p101, %p102
    %p104 = scmp.ne.s32.totalorder %s96, %s99
    %p105 = scmp.eq.s32.totalorder %s9, 0
    %p106 = por %p104, %p105
    %p107 = scmp.ne.s32.totalorder %s96, %s99
    %p108 = scmp.eq.s32.totalorder %s14, 7
    %p109 = por %p107, %p108
    %p110 = scmp.ne.s32.totalorder %s99, %s100
    %p111 = scmp.eq.s32.totalorder %s14, 0
    %p112 = por %p110, %p111
    %p113 = scmp.ne.s32.totalorder %s99, %s100
    %p114 = scmp.eq.s32.totalorder %s15, 7
    %p115 = por %p113, %p114
    %p117 = scmp.ne.s32.totalorder %s100, %s116
    %p118 = scmp.eq.s32.totalorder %s15, 0
    %p119 = por %p117, %p118
    %s120 = ssub.s32 %s16, %s35
    %s121 = ssub.s32 %s17, %s31
    %s122 = sor.u32 %s120, %s121
    %p123 = scmp.eq.s32.totalorder %s122, 0
    %s125 = sadd.s32 %s124, 1
    %s126 = scalar_select %p123, %s124, %s125
    %p129 = pneg %p123
    %p130 = scmp.eq.s32.totalorder %s9, 7
    %p131 = por %p129, %p130
    %p132 = scmp.ne.s32.totalorder %s124, %s127
    %p133 = scmp.eq.s32.totalorder %s9, 0
    %p134 = por %p132, %p133
    %p135 = scmp.ne.s32.totalorder %s124, %s127
    %p136 = scmp.eq.s32.totalorder %s14, 7
    %p137 = por %p135, %p136
    %p138 = scmp.ne.s32.totalorder %s127, %s128
    %p139 = scmp.eq.s32.totalorder %s14, 0
    %p140 = por %p138, %p139
    %p141 = scmp.ne.s32.totalorder %s127, %s128
    %p142 = scmp.eq.s32.totalorder %s15, 7
    %p143 = por %p141, %p142
    %p145 = scmp.ne.s32.totalorder %s128, %s144
    %p146 = scmp.eq.s32.totalorder %s15, 0
    %p147 = por %p145, %p146
    %p148 = scmp.le.s32.totalorder 1, %s9
    %p149 = scmp.lt.s32.totalorder %s9, 9
    %p150 = pnand %p148, %p149
    %p151 = pneg %p150
    // Predicated region
    $region9: #{multi_head_attention.6} parent=5 // pred_check
      _
    $region10: #{multi_head_attention.6} parent=5 // pred_check_branch
      %153 = sbr.rel (%p150) target = $region12
    $region11: #{multi_head_attention.6} parent=5 // pred_region
      %s154 = ssub.s32 %s9, 1
    $region12: #{multi_head_attention.6} parent=5 // pred_fallthru
      _
    %p155 = scmp.lt.s32.totalorder %s9, 8
    // Predicated region
    $region13: #{multi_head_attention.6} parent=5 // pred_check
      %p156 = pneg %p155
    $region14: #{multi_head_attention.6} parent=5 // pred_check_branch
      %158 = sbr.rel (%p156) target = $region16
    $region15: #{multi_head_attention.6} parent=5 // pred_region
      // Predicated region
      $region17: #{multi_head_attention.6} parent=15 // pred_check
        %p159 = pneg %p50
      $region18: #{multi_head_attention.6} parent=15 // pred_check_branch
        %161 = sbr.rel (%p159) target = $region20
      $region19: #{multi_head_attention.6} parent=15 // pred_region
        %s162 = smul.u32 2, %s17
        %p163 = scmp.lt.s32.totalorder %s16, 7
        %s164 = scalar_select %p163, %s16, 7
        %p165 = scmp.lt.s32.totalorder %s162, 1
        %s166 = scalar_select %p165, %s162, 1
        %s167 = smul.addr %s164, 2
        %s168 = sadd.s32 %s166, %s167
        %s169 = smul.addr %s168, 4
        %s170 = scalar_lea.vmem %s0, %s169
        %s171 = smul.u32 2, %s17
      $region20: #{multi_head_attention.6} parent=15 // pred_fallthru
        _
      // Predicated region
      $region21: #{multi_head_attention.6} parent=15 // pred_check
        %p172 = pneg %p78
      $region22: #{multi_head_attention.6} parent=15 // pred_check_branch
        %174 = sbr.rel (%p172) target = $region24
      $region23: #{multi_head_attention.6} parent=15 // pred_region
        %s175 = smul.u32 2, %s18
        %p176 = scmp.lt.s32.totalorder %s16, 7
        %s177 = scalar_select %p176, %s16, 7
        %p178 = scmp.lt.s32.totalorder %s175, 1
        %s179 = scalar_select %p178, %s175, 1
        %s180 = smul.addr %s177, 2
        %s181 = sadd.s32 %s179, %s180
        %s182 = smul.addr %s181, 4
        %s183 = scalar_lea.vmem %s1, %s182
        %s184 = smul.u32 2, %s18
      $region24: #{multi_head_attention.6} parent=15 // pred_fallthru
        _
      // Predicated region
      $region25: #{multi_head_attention.6} parent=15 // pred_check
        %p185 = pneg %p106
      $region26: #{multi_head_attention.6} parent=15 // pred_check_branch
        %187 = sbr.rel (%p185) target = $region28
      $region27: #{multi_head_attention.6} parent=15 // pred_region
        %s188 = smul.u32 2, %s18
        %p189 = scmp.lt.s32.totalorder %s16, 7
        %s190 = scalar_select %p189, %s16, 7
        %p191 = scmp.lt.s32.totalorder %s188, 1
        %s192 = scalar_select %p191, %s188, 1
        %s193 = smul.addr %s190, 2
        %s194 = sadd.s32 %s192, %s193
        %s195 = smul.addr %s194, 4
        %s196 = scalar_lea.vmem %s2, %s195
        %s197 = smul.u32 2, %s18
      $region28: #{multi_head_attention.6} parent=15 // pred_fallthru
        _
    $region16: #{multi_head_attention.6} parent=5 // pred_fallthru
      _
    %p198 = scmp.le.s32.totalorder 1, %s9
    %p199 = scmp.lt.s32.totalorder %s9, 9
    %p200 = pnand %p198, %p199
    %p201 = pneg %p200
    // Predicated region
    $region29: #{multi_head_attention.6} parent=5 // pred_check
      _
    $region30: #{multi_head_attention.6} parent=5 // pred_check_branch
      %203 = sbr.rel (%p200) target = $region32
    $region31: #{multi_head_attention.6} parent=5 // pred_region
      %s204 = ssub.s32 %s9, 1
      %s205 = smul.u32 2, %s20
      %p206 = scmp.lt.s32.totalorder %s19, 7
      %s207 = scalar_select %p206, %s19, 7
      %p208 = scmp.lt.s32.totalorder %s205, 1
      %s209 = scalar_select %p208, %s205, 1
      %s210 = smul.addr %s207, 2
      %s211 = sadd.s32 %s209, %s210
      %s212 = smul.addr %s211, 4
      %s213 = scalar_lea.vmem %s0, %s212
      %p214 = pneg %p56
      %p215 = pneg %p53
      %s216 = smul.u32 2, %s21
      %p217 = scmp.lt.s32.totalorder %s19, 7
      %s218 = scalar_select %p217, %s19, 7
      %p219 = scmp.lt.s32.totalorder %s216, 1
      %s220 = scalar_select %p219, %s216, 1
      %s221 = smul.addr %s218, 2
      %s222 = sadd.s32 %s220, %s221
      %s223 = smul.addr %s222, 4
      %s224 = scalar_lea.vmem %s1, %s223
      %p225 = pneg %p84
      %p226 = pneg %p81
      %s227 = smul.u32 2, %s21
      %p228 = scmp.lt.s32.totalorder %s19, 7
      %s229 = scalar_select %p228, %s19, 7
      %p230 = scmp.lt.s32.totalorder %s227, 1
      %s231 = scalar_select %p230, %s227, 1
      %s232 = smul.addr %s229, 2
      %s233 = sadd.s32 %s231, %s232
      %s234 = smul.addr %s233, 4
      %s235 = scalar_lea.vmem %s2, %s234
      %p236 = pneg %p112
      %p237 = pneg %p109
      %p238 = pneg %p140
      %p239 = pneg %p137
      %s240 = smul.u32 2, %s20
      %p241 = scmp.lt.s32.totalorder %s19, 7
      %s242 = scalar_select %p241, %s19, 7
      %p243 = scmp.lt.s32.totalorder %s240, 1
      %s244 = scalar_select %p243, %s240, 1
      %s245 = smul.addr %s242, 2
      %s246 = sadd.s32 %s244, %s245
      %s247 = smul.addr %s246, 4
      %s248 = scalar_lea.vmem %s3, %s247
      %s249 = smul.u32 2, %s20
      %p250 = scmp.lt.s32.totalorder %s19, 7
      %s251 = scalar_select %p250, %s19, 7
      %p252 = scmp.lt.s32.totalorder %s249, 1
      %s253 = scalar_select %p252, %s249, 1
      %s254 = smul.addr %s251, 2
      %s255 = sadd.s32 %s253, %s254
      %s256 = smul.addr %s255, 4
      %s257 = scalar_lea.vmem %s0, %s256
      %s258 = smul.u32 2, %s20
      %s259 = smul.u32 2, %s21
      %p260 = scmp.lt.s32.totalorder %s19, 7
      %s261 = scalar_select %p260, %s19, 7
      %p262 = scmp.lt.s32.totalorder %s259, 1
      %s263 = scalar_select %p262, %s259, 1
      %s264 = smul.addr %s261, 2
      %s265 = sadd.s32 %s263, %s264
      %s266 = smul.addr %s265, 4
      %s267 = scalar_lea.vmem %s1, %s266
      %s268 = smul.u32 2, %s21
      %s269 = smul.u32 2, %s21
      %p270 = scmp.lt.s32.totalorder %s19, 7
      %s271 = scalar_select %p270, %s19, 7
      %p272 = scmp.lt.s32.totalorder %s269, 1
      %s273 = scalar_select %p272, %s269, 1
      %s274 = smul.addr %s271, 2
      %s275 = sadd.s32 %s273, %s274
      %s276 = smul.addr %s275, 4
      %s277 = scalar_lea.vmem %s2, %s276
      %s278 = smul.u32 2, %s21
      %s279 = smul.u32 2, %s20
      %p280 = scmp.lt.s32.totalorder %s19, 7
      %s281 = scalar_select %p280, %s19, 7
      %p282 = scmp.lt.s32.totalorder %s279, 1
      %s283 = scalar_select %p282, %s279, 1
      %s284 = smul.addr %s281, 2
      %s285 = sadd.s32 %s283, %s284
      %s286 = smul.addr %s285, 4
      %s287 = scalar_lea.vmem %s3, %s286
      %s288 = smul.u32 2, %s20
      %p290 = scmp.eq.s32.totalorder %s21, 0
      // Predicated region
      $region33: #{multi_head_attention.6} parent=31 // pred_check
        %p291 = pneg %p290
      $region34: #{multi_head_attention.6} parent=31 // pred_check_branch
        %293 = sbr.rel (%p291) target = $region36
      $region35: #{multi_head_attention.6} parent=31 // pred_region
        %vm294 = vcmask 7168
        %295 = vst.msk [vmem:[#allocation2] sm:$0xff] %vm294, -inf
        %296 = vst.msk [vmem:[#allocation2 + $0x8] sm:$0xff] %vm294, -inf
        %297 = vst.msk [vmem:[#allocation3] sm:$0xff] %vm294, 0.0
        %298 = vst.msk [vmem:[#allocation3 + $0x8] sm:$0xff] %vm294, 0.0
        %vm299 = vcmask 130048
        %300 = vst.msk [vmem:[#allocation4] sm:$0xff] %vm299, 0.0
        %301 = vst.msk [vmem:[#allocation4 + $0x8] sm:$0xff] %vm299, 0.0
      $region36: #{multi_head_attention.6} parent=31 // pred_fallthru
        _
      %v302 = vld [vmem:[%s257] sm:$0xf]
      %v303 = vld [vmem:[%s257 + $0x4] sm:$0xf]
      %v304 = vld [vmem:[%s267] sm:$0xf]
      %v305 = vld [vmem:[%s267 + $0x4] sm:$0xf]
      %v308 = vunpack.c.l.b16 %v302
      %v309 = vunpack.c.l.b16 %v303
      %v310 = vpack.c.b16 %v309, %v308
      %v313 = vunpack.c.l.b16 %v304
      %v314 = vunpack.c.l.b16 %v305
      %v315 = vpack.c.b16 %v314, %v313
      %vm316 = vcmask 130048
      %v318 = vsel %vm316, %v310, 0
      %v321 = vsel %vm316, %v315, 0
      %323 = vmatpush.bf16.xpose.msra.mxu0 0
      %324 = vmatpush.bf16.xpose.msra.mxu0 0
      %325 = vmatpush.bf16.xpose.msra.mxu0 0
      %326 = vmatpush.bf16.xpose.msra.mxu0 0
      %327 = vmatpush.bf16.xpose.msra.mxu0 0
      %328 = vmatpush.bf16.xpose.msra.mxu0 0
      %329 = vmatpush.bf16.xpose.msra.mxu0 0
      %330 = vmatpush.bf16.xpose.msra.mxu0 %v321
      %331 = vmatmul.bf16.gmra.mxu0 %v318
      %v332 = vpop.f32.mrf.mxu0
      %v333 = vadd.f32 0.0, %v332
      %v334 = vpop.f32.mrf.mxu0
      %v335 = vadd.f32 0.0, %v334
      %336 = vdwg.mxu0
      %v337 = vld [vmem:[#allocation2] sm:$0xff]
      %v338 = vld [vmem:[#allocation2 + $0x8] sm:$0xff]
      %v339 = vsel %vm316, %v333, -inf
      %340 = vmax.xlane.f32.xlu0 %v339
      %v341 = vpop.xlane.xlu0 %340
      %v342 = vsel %vm316, %v335, -inf
      %343 = vmax.xlane.f32.xlu0 %v342
      %v344 = vpop.xlane.xlu0 %343
      %v345 = vmax.f32 %v337, %v341
      %v346 = vmax.f32 %v338, %v344
      %v347 = vsub.f32 %v337, %v345
      %v348 = vsub.f32 %v338, %v346
      %v349 = vmul.f32 %v347, 1.442695
      %v350 = vpow.pop %v349
      %v351 = vmul.f32 %v348, 1.442695
      %v352 = vpow.pop %v351
      %354 = vset.pattern.permute.xlu0 0
      %355 = vperm.xlu0 %354, %v345
      %v356 = vpop.permute.xlu0 %355
      %359 = vset.pattern.permute.xlu0 0
      %360 = vperm.xlu0 %359, %v346
      %v361 = vpop.permute.xlu0 %360
      %v363 = vsub.f32 %v333, %v356
      %v364 = vsub.f32 %v335, %v361
      %v365 = vmul.f32 %v363, 1.442695
      %v366 = vpow.pop %v365
      %v367 = vmul.f32 %v364, 1.442695
      %v368 = vpow.pop %v367
      %v369 = vld [vmem:[#allocation3] sm:$0xff]
      %v370 = vld [vmem:[#allocation3 + $0x8] sm:$0xff]
      %v371 = vmul.f32 %v350, %v369
      %v372 = vmul.f32 %v352, %v370
      %v373 = vsel %vm316, %v366, 0.0
      %374 = vadd.xlane.f32.xlu0 %v373
      %v375 = vpop.xlane.xlu0 %374
      %v376 = vsel %vm316, %v368, 0.0
      %377 = vadd.xlane.f32.xlu0 %v376
      %v378 = vpop.xlane.xlu0 %377
      %v379 = vadd.f32 %v371, %v375
      %v380 = vadd.f32 %v372, %v378
      %vm381 = vcmask 7168
      %382 = vst.msk [vmem:[#allocation3] sm:$0xff] %vm381, %v379
      %383 = vst.msk [vmem:[#allocation3 + $0x8] sm:$0xff] %vm381, %v380
      %v384 = vld [vmem:[#allocation4] sm:$0xff]
      %v385 = vld [vmem:[#allocation4 + $0x8] sm:$0xff]
      %387 = vset.pattern.permute.xlu0 0
      %388 = vperm.xlu0 %387, %v350
      %v389 = vpop.permute.xlu0 %388
      %392 = vset.pattern.permute.xlu0 0
      %393 = vperm.xlu0 %392, %v352
      %v394 = vpop.permute.xlu0 %393
      %v396 = vmul.f32 %v389, %v384
      %v397 = vmul.f32 %v394, %v385
      %v398 = vpack.c.bf16 %v368, %v366
      %v399 = vld [vmem:[%s277] sm:$0xf]
      %v400 = vld [vmem:[%s277 + $0x4] sm:$0xf]
      %v403 = vunpack.c.l.b16 %v399
      %v404 = vunpack.c.l.b16 %v400
      %v405 = vpack.c.b16 %v404, %v403
      %v408 = vsel %vm316, %v398, 0
      %410 = vmatpush.bf16.msra.mxu0 0
      %411 = vmatpush.bf16.msra.mxu0 0
      %412 = vmatpush.bf16.msra.mxu0 0
      %413 = vmatpush.bf16.msra.mxu0 0
      %414 = vmatpush.bf16.msra.mxu0 0
      %415 = vmatpush.bf16.msra.mxu0 0
      %416 = vmatpush.bf16.msra.mxu0 0
      %417 = vmatpush.bf16.msra.mxu0 %v405
      %418 = vmatmul.bf16.gmra.mxu0 %v408
      %v419 = vpop.f32.mrf.mxu0
      %v420 = vadd.f32 0.0, %v419
      %v421 = vpop.f32.mrf.mxu0
      %v422 = vadd.f32 0.0, %v421
      %423 = vdwg.mxu0
      %v424 = vadd.f32 %v396, %v420
      %v425 = vadd.f32 %v397, %v422
      %426 = vst.msk [vmem:[#allocation4] sm:$0xff] %vm316, %v424
      %427 = vst.msk [vmem:[#allocation4 + $0x8] sm:$0xff] %vm316, %v425
      %428 = vst.msk [vmem:[#allocation2] sm:$0xff] %vm381, %v345
      %429 = vst.msk [vmem:[#allocation2 + $0x8] sm:$0xff] %vm381, %v346
      // Predicated region
      $region37: #{multi_head_attention.6} parent=31 // pred_check
        %p430 = pneg %p290
      $region38: #{multi_head_attention.6} parent=31 // pred_check_branch
        %432 = sbr.rel (%p430) target = $region40
      $region39: #{multi_head_attention.6} parent=31 // pred_region
        %v433 = vld [vmem:[#allocation4] sm:$0xff]
        %v434 = vld [vmem:[#allocation4 + $0x8] sm:$0xff]
        %v435 = vld [vmem:[#allocation3] sm:$0xff]
        %v436 = vld [vmem:[#allocation3 + $0x8] sm:$0xff]
        %v437 = vrcp.pop %v435
        %v438 = vrcp.pop %v436
        %440 = vset.pattern.permute.xlu0 0
        %441 = vperm.xlu0 %440, %v437
        %v442 = vpop.permute.xlu0 %441
        %445 = vset.pattern.permute.xlu0 0
        %446 = vperm.xlu0 %445, %v438
        %v447 = vpop.permute.xlu0 %446
        %v449 = vmul.f32 %v433, %v442
        %v450 = vmul.f32 %v434, %v447
        %v451 = vpack.c.bf16 %v449, %v449
        %v452 = vpack.c.bf16 %v450, %v450
        %vm453 = vcmask 125952
        %454 = vst.msk [vmem:[%s287] sm:$0xf] %vm453, %v451
        %455 = vst.msk [vmem:[%s287 + $0x4] sm:$0xf] %vm453, %v452
      $region40: #{multi_head_attention.6} parent=31 // pred_fallthru
        _
      %s456 = smul.u32 2, %s20
      %p457 = scmp.lt.s32.totalorder %s19, 7
      %s458 = scalar_select %p457, %s19, 7
      %p459 = scmp.lt.s32.totalorder %s456, 1
      %s460 = scalar_select %p459, %s456, 1
      %s461 = smul.addr %s458, 2
      %s462 = sadd.s32 %s460, %s461
      %s463 = smul.addr %s462, 4
      %s464 = scalar_lea.vmem %s3, %s463
      // Predicated region
      $region41: #{multi_head_attention.6} parent=31 // pred_check
        %p465 = pneg %p137
      $region42: #{multi_head_attention.6} parent=31 // pred_check_branch
        %467 = sbr.rel (%p465) target = $region44
      $region43: #{multi_head_attention.6} parent=31 // pred_region
        %s468 = smul.u32 2, %s20
      $region44: #{multi_head_attention.6} parent=31 // pred_fallthru
        _
    $region32: #{multi_head_attention.6} parent=5 // pred_fallthru
      _
    %p469 = scmp.le.s32.totalorder 2, %s9
    // Predicated region
    $region45: #{multi_head_attention.6} parent=5 // pred_check
      %p470 = pneg %p469
    $region46: #{multi_head_attention.6} parent=5 // pred_check_branch
      %472 = sbr.rel (%p470) target = $region48
    $region47: #{multi_head_attention.6} parent=5 // pred_region
      %s473 = ssub.s32 %s9, 2
      // Predicated region
      $region49: #{multi_head_attention.6} parent=47 // pred_check
        %p474 = pneg %p143
      $region50: #{multi_head_attention.6} parent=47 // pred_check_branch
        %476 = sbr.rel (%p474) target = $region52
      $region51: #{multi_head_attention.6} parent=47 // pred_region
        %s477 = smul.u32 2, %s23
        %p478 = scmp.lt.s32.totalorder %s22, 7
        %s479 = scalar_select %p478, %s22, 7
        %p480 = scmp.lt.s32.totalorder %s477, 1
        %s481 = scalar_select %p480, %s477, 1
        %s482 = smul.addr %s479, 2
        %s483 = sadd.s32 %s481, %s482
        %s484 = smul.addr %s483, 4
        %s485 = scalar_lea.vmem %s3, %s484
      $region52: #{multi_head_attention.6} parent=47 // pred_fallthru
        _
    $region48: #{multi_head_attention.6} parent=5 // pred_fallthru
      _
  $region6: #{multi_head_attention.6} parent=0 // loop_footer
    %s13 = sadd.s32 1, %s9
  $region7: #{multi_head_attention.6} parent=0 // loop_footer_branch
    %8 = sbr.rel target = $region3
  $region8: #{multi_head_attention.6} parent=0 // loop_exit
    _

// kernel: multi_head_attention.7
$region0: #{multi_head_attention.7}
  #allocation0 [shape = 'u32[]', space=smem, size = 0x4, offset = 0x4, fixed_abs, tag = 'smem constant byte address 0x4 - core index']
  #allocation1 [shape = 'u32[72,128]{1,0:T(1,128)}', space=vmem, size = 0x9000, scoped, tag = 'internal scratch']
  #allocation2 [shape = 'f32[32,64]{1,0:T(8,128)}', space=vmem, size = 0x4000, scoped, tag = 'scratch operand']
  %s0 = inlined_call_operand.vmem [shape: bf16[32,64], index: 0, kind: input, shape index: {}]
  %s1 = inlined_call_operand.vmem [shape: bf16[64,64], index: 1, kind: input, shape index: {}]
  %s2 = inlined_call_operand.vmem [shape: f32[1,64], index: 2, kind: input, shape index: {}]
  %s3 = inlined_call_operand.hbm [shape: f32[32,64], index: 3, kind: output, shape index: {}]
  %s4 = sld [smem:[#allocation0]]
  $region30: #{multi_head_attention.7} parent=0
    _
  %s6 = ssub.s32 1, %s4
  %s7 = scalar_select 0, %s6, %s4
  $region1: #{multi_head_attention.7} parent=0
    #allocation3 [shape = 'u8[16384]{0}', space=vmem, size = 0x4000, scoped, tag = 'output window, operand 0, single buffered']
    #allocation4 [shape = 's32[1]{0}', space=sflag, size = 0x4, scoped, tag = 'scoped memory for multi_head_attention.7']
    %8 = vsyncpa [#allocation4], 0
    // Predicated region
    $region2: #{multi_head_attention.7} parent=1 // pred_check
      _
    $region3: #{multi_head_attention.7} parent=1 // pred_check_branch
      %10 = sbr.rel (0) target = $region5
    $region4: #{multi_head_attention.7} parent=1 // pred_region
      _
    $region5: #{multi_head_attention.7} parent=1 // pred_fallthru
      _
    // Predicated region
    $region6: #{multi_head_attention.7} parent=1 // pred_check
      _
    $region7: #{multi_head_attention.7} parent=1 // pred_check_branch
      %12 = sbr.rel (0) target = $region9
    $region8: #{multi_head_attention.7} parent=1 // pred_region
      _
    $region9: #{multi_head_attention.7} parent=1 // pred_fallthru
      _
    // Predicated region
    $region10: #{multi_head_attention.7} parent=1 // pred_check
      _
    $region11: #{multi_head_attention.7} parent=1 // pred_check_branch
      %14 = sbr.rel (0) target = $region13
    $region12: #{multi_head_attention.7} parent=1 // pred_region
      _
    $region13: #{multi_head_attention.7} parent=1 // pred_fallthru
      _
    %p16 = scmp.eq.s32.totalorder 0, 0
    // Predicated region
    $region14: #{multi_head_attention.7} parent=1 // pred_check
      %p17 = pneg %p16
    $region15: #{multi_head_attention.7} parent=1 // pred_check_branch
      %19 = sbr.rel (%p17) target = $region17
    $region16: #{multi_head_attention.7} parent=1 // pred_region
      %vm20 = vcmask 523264
      %21 = vst.msk [vmem:[#allocation2] sm:$0xff] %vm20, 0.0
      %22 = vst.msk [vmem:[#allocation2 + $0x8] sm:$0xff] %vm20, 0.0
      %23 = vst.msk [vmem:[#allocation2 + $0x10] sm:$0xff] %vm20, 0.0
      %24 = vst.msk [vmem:[#allocation2 + $0x18] sm:$0xff] %vm20, 0.0
    $region17: #{multi_head_attention.7} parent=1 // pred_fallthru
      _
    %v25 = vld [vmem:[#allocation2] sm:$0xff]
    %v26 = vld [vmem:[#allocation2 + $0x8] sm:$0xff]
    %v27 = vld [vmem:[#allocation2 + $0x10] sm:$0xff]
    %v28 = vld [vmem:[#allocation2 + $0x18] sm:$0xff]
    %v29 = vld [vmem:[%s0] sm:$0xf]
    %v30 = vld [vmem:[%s0 + $0x4] sm:$0xf]
    %v31 = vld [vmem:[%s0 + $0x8] sm:$0xf]
    %v32 = vld [vmem:[%s0 + $0xc] sm:$0xf]
    %v33 = vld [vmem:[%s1] sm:$0xf]
    %v34 = vld [vmem:[%s1 + $0x4] sm:$0xf]
    %v35 = vld [vmem:[%s1 + $0x8] sm:$0xf]
    %v36 = vld [vmem:[%s1 + $0xc] sm:$0xf]
    %v37 = vld [vmem:[%s1 + $0x10] sm:$0xf]
    %v38 = vld [vmem:[%s1 + $0x14] sm:$0xf]
    %v39 = vld [vmem:[%s1 + $0x18] sm:$0xf]
    %v40 = vld [vmem:[%s1 + $0x1c] sm:$0xf]
    %v45 = vunpack.c.l.b16 %v29
    %v46 = vunpack.c.l.b16 %v30
    %v47 = vunpack.c.l.b16 %v31
    %v48 = vunpack.c.l.b16 %v32
    %v49 = vpack.c.b16 %v46, %v45
    %v50 = vpack.c.b16 %v48, %v47
    %v59 = vunpack.c.l.b16 %v33
    %v60 = vunpack.c.l.b16 %v34
    %v61 = vunpack.c.l.b16 %v35
    %v62 = vunpack.c.l.b16 %v36
    %v63 = vunpack.c.l.b16 %v37
    %v64 = vunpack.c.l.b16 %v38
    %v65 = vunpack.c.l.b16 %v39
    %v66 = vunpack.c.l.b16 %v40
    %v67 = vpack.c.b16 %v60, %v59
    %v68 = vpack.c.b16 %v62, %v61
    %v69 = vpack.c.b16 %v64, %v63
    %v70 = vpack.c.b16 %v66, %v65
    %vm75 = vcmask 523264
    %v77 = vsel %vm75, %v49, 0
    %v80 = vsel %vm75, %v50, 0
    %82 = vmatpush.bf16.msra.mxu0 0
    %83 = vmatpush.bf16.msra.mxu0 0
    %84 = vmatpush.bf16.msra.mxu0 0
    %85 = vmatpush.bf16.msra.mxu0 0
    %86 = vmatpush.bf16.msra.mxu0 %v70
    %87 = vmatpush.bf16.msra.mxu0 %v69
    %88 = vmatpush.bf16.msra.mxu0 %v68
    %89 = vmatpush.bf16.msra.mxu0 %v67
    %90 = vmatmul.bf16.gmra.mxu0 %v77
    %v91 = vpop.f32.mrf.mxu0
    %v92 = vadd.f32 0.0, %v91
    %v93 = vpop.f32.mrf.mxu0
    %v94 = vadd.f32 0.0, %v93
    %95 = vmatmul.bf16.gmra.mxu0 %v80
    %v96 = vpop.f32.mrf.mxu0
    %v97 = vadd.f32 0.0, %v96
    %v98 = vpop.f32.mrf.mxu0
    %v99 = vadd.f32 0.0, %v98
    %100 = vdwg.mxu0
    %v101 = vadd.f32 %v25, %v92
    %v102 = vadd.f32 %v26, %v94
    %v103 = vadd.f32 %v27, %v97
    %v104 = vadd.f32 %v28, %v99
    %105 = vst.msk [vmem:[#allocation2] sm:$0xff] %vm75, %v101
    %106 = vst.msk [vmem:[#allocation2 + $0x8] sm:$0xff] %vm75, %v102
    %107 = vst.msk [vmem:[#allocation2 + $0x10] sm:$0xff] %vm75, %v103
    %108 = vst.msk [vmem:[#allocation2 + $0x18] sm:$0xff] %vm75, %v104
    // Predicated region
    $region18: #{multi_head_attention.7} parent=1 // pred_check
      %p109 = pneg %p16
    $region19: #{multi_head_attention.7} parent=1 // pred_check_branch
      %111 = sbr.rel (%p109) target = $region21
    $region20: #{multi_head_attention.7} parent=1 // pred_region
      %v112 = vld [vmem:[#allocation2] sm:$0xff]
      %v113 = vld [vmem:[#allocation2 + $0x8] sm:$0xff]
      %v114 = vld [vmem:[#allocation2 + $0x10] sm:$0xff]
      %v115 = vld [vmem:[#allocation2 + $0x18] sm:$0xff]
      %v116 = vld [vmem:[%s2] sm:$0x1]
      %v118 = vperm.slane %v116, 0
      %v120 = vadd.f32 %v112, %v118
      %v121 = vadd.f32 %v113, %v118
      %v122 = vadd.f32 %v114, %v118
      %v123 = vadd.f32 %v115, %v118
      %124 = vst.msk [vmem:[#allocation3] sm:$0xff] %vm75, %v120
      %125 = vst.msk [vmem:[#allocation3 + $0x8] sm:$0xff] %vm75, %v121
      %126 = vst.msk [vmem:[#allocation3 + $0x10] sm:$0xff] %vm75, %v122
      %127 = vst.msk [vmem:[#allocation3 + $0x18] sm:$0xff] %vm75, %v123
    $region21: #{multi_head_attention.7} parent=1 // pred_fallthru
      _
    // Predicated region
    $region22: #{multi_head_attention.7} parent=1 // pred_check
      _
    $region23: #{multi_head_attention.7} parent=1 // pred_check_branch
      %129 = sbr.rel (0) target = $region25
    $region24: #{multi_head_attention.7} parent=1 // pred_region
      %131 = vsyncadd [#allocation4], 0
      %s132 = sshll.u32 [#allocation3], 4
      %s133 = int_to_ptr.vmem [resolvable:$true] %s132
      %s134 = sshll.u32 %s3, 4
      %s135 = int_to_ptr.hbm [resolvable:$true] %s134
      %140 = dma.vmem_to_hbm [thread:$0]  %s133, 512, %s135, [#allocation4], 128, 128, 8
    $region25: #{multi_head_attention.7} parent=1 // pred_fallthru
      _
    // Predicated region
    $region26: #{multi_head_attention.7} parent=1 // pred_check
      _
    $region27: #{multi_head_attention.7} parent=1 // pred_check_branch
      %142 = sbr.rel (0) target = $region29
    $region28: #{multi_head_attention.7} parent=1 // pred_region
      %144 = dma.done [#allocation4], 512
    $region29: #{multi_head_attention.7} parent=1 // pred_fallthru
      _
    %145 = vsyncpa [#allocation4], 1

</llo_original>
